<compile_context>
chip_gen: v6e
topology: v6e:2x2x1
jax: 0.10.0
libtpu: 0.0.40
codegen_flags: <defaults>
</compile_context>

<pallas_src>
import functools

import jax
import jax.numpy as jnp
from jax import lax
from jax.experimental import pallas as pl
from jax.experimental.pallas import tpu as pltpu


# ----------------------------- Pallas kernel --------------------------------


def _make_conv_kernel(TH, Wo, Cin, n_t):
    """Kernel for one (batch n, output-row-tile t) grid step.

    Refs (in order):
      6 tap planes  (rows_p, Cin)   bf16, VMEM-resident for the whole batch element
      w_ref         (9, Cin, Cout)  bf16, VMEM-resident (constant index_map)
      b_ref         (1, Cout)       f32
      o_ref         (TH*Wo, Cout)   output tile (flattened output pixels)

    Tap (kh, kw) of output pixel (oh, ow) lives at flattened row
    (oh + kh//2) * Wo + ow of plane[(kh % 2) * 3 + kw], so each tap tile is a
    single contiguous pl.ds row slice of a resident plane.  The nine
    (TH*Wo, Cin) x (Cin, Cout) dots accumulate in f32 registers within this one
    grid step (no scratch, no extra grid axis).
    """
    THW = TH * Wo

    def kernel(pe0, pe1, pe2, po0, po1, po2, w_ref, b_ref, o_ref):
        planes = (pe0, pe1, pe2, po0, po1, po2)
        if n_t == 1:
            row_base = 0                                   # fully static slices
        else:
            row_base = pl.multiple_of(pl.program_id(1) * THW, THW)
        acc = None
        for kh in range(3):
            hp, dh = kh % 2, kh // 2                       # H parity / +1 row shift
            for kw in range(3):
                p_ref = planes[hp * 3 + kw]
                tap = p_ref[pl.ds(row_base + dh * Wo, THW), :]     # (THW, Cin)
                part = jnp.dot(tap, w_ref[kh * 3 + kw],
                               preferred_element_type=jnp.float32)
                acc = part if acc is None else acc + part
        o_ref[...] = (acc + b_ref[...]).astype(o_ref.dtype)

    return kernel


# ------------------------------ JAX glue -------------------------------------


def _pick_tile_rows(N, Ho, Wo, Cout):
    """Output-row tile TH: divides Ho (no ragged tile, no padding / post-slice),
    gives a multi-MiB tile to amortize per-grid-step overhead, keeps TH*Wo
    sublane-aligned unless it is the full extent, and keeps N*n_t >= 2 when
    possible so both TensorCores get work."""
    max_rows = max(1024, min(16384, (4 << 20) // (4 * max(Cout, 1))))
    th_cap = max(1, min(Ho, max_rows // max(Wo, 1)))
    if N == 1 and Ho >= 2:
        th_cap = min(th_cap, max(1, (Ho + 1) // 2))
    for d in range(th_cap, 0, -1):
        if Ho % d == 0 and (d == Ho or (d * Wo) % 8 == 0):
            return d
    return Ho


def _vmem_limit_bytes(per_call_bytes):
    """Generation-aware scoped-VMEM budget: ~half of physical VMEM (64 MiB on
    v5e/v6e's 128 MiB, 32 MiB on v7x's 64 MiB), bumped if this call's resident
    working set needs more, capped well below physical."""
    try:
        cap = int(getattr(pltpu.get_tpu_info(), "vmem_capacity_bytes", 0)) or (64 << 20)
    except Exception:                      # conservative fallback if query unsupported
        cap = 64 << 20
    want = int(per_call_bytes * 1.5) + (4 << 20)
    return int(min(max(cap // 2, want), int(cap * 0.85)))


def conv2d_s2_pallas(x_nhwc, w_oihw, bias, *, compute_dtype=jnp.bfloat16):
    """3x3 / stride-2 / pad-1 conv, NHWC in -> NHWC out (f32 accumulate)."""
    N, H, W, Cin = x_nhwc.shape
    Cout = w_oihw.shape[0]
    Ho = (H - 1) // 2 + 1
    Wo = (W - 1) // 2 + 1

    # Zero-pad so padded dims are exactly (2*Ho + 1, 2*Wo + 1): 1 on top/left (the
    # conv's padding=1) and 0/1 on bottom/right depending on parity.
    xp = jnp.pad(x_nhwc, ((0, 0), (1, 2 * Ho - H), (1, 2 * Wo - W), (0, 0)))
    xp = xp.astype(compute_dtype)                       # bf16 streaming

    # Six tap planes: H parity (kh % 2) x kw shift, flattened to (N, rows, Cin).
    planes, plane_rows = [], []
    for hp in (0, 1):
        hh = Ho + 1 if hp == 0 else Ho
        for kw in range(3):
            plane = xp[:, hp::2, kw:kw + 2 * Wo:2, :].reshape(N, hh * Wo, Cin)
            planes.append(plane)
            plane_rows.append(hh * Wo)

    # OIHW -> (kh, kw, Cin, Cout) -> (9, Cin, Cout); tap index = kh*3 + kw.
    w3 = jnp.transpose(w_oihw, (2, 3, 1, 0)).reshape(9, Cin, Cout).astype(compute_dtype)
    b2 = bias.reshape(1, Cout).astype(jnp.float32)

    TH = _pick_tile_rows(N, Ho, Wo, Cout)
    n_t = Ho // TH
    THW = TH * Wo

    # Rough VMEM footprint (lane dim padded to 128, x2 double buffering) and HBM bytes.
    def _lane(c):
        return -(-c // 128) * 128

    isz = jnp.dtype(compute_dtype).itemsize
    osz = jnp.dtype(x_nhwc.dtype).itemsize
    vmem_est = (sum(r * _lane(Cin) for r in plane_rows) * isz * 2
                + 9 * max(Cin, 16) * _lane(Cout) * isz * 2
                + THW * _lane(Cout) * (osz * 2 + 4))
    hbm_bytes = (sum(int(p.size) for p in planes) * isz
                 + int(w3.size) * isz + int(b2.size) * 4
                 + N * Ho * Wo * Cout * osz)

    kernel = _make_conv_kernel(TH, Wo, Cin, n_t)

    out = pl.pallas_call(
        kernel,
        out_shape=jax.ShapeDtypeStruct((N, Ho * Wo, Cout), x_nhwc.dtype),
        grid_spec=pltpu.PrefetchScalarGridSpec(
            num_scalar_prefetch=0,
            grid=(N, n_t),
            in_specs=(
                # Tap planes: full plane per batch element, constant along the
                # row-tile axis -> DMA'd once per n, VMEM-resident across t.
                [pl.BlockSpec((None, r, Cin), lambda n, t: (n, 0, 0))
                 for r in plane_rows]
                + [pl.BlockSpec((9, Cin, Cout), lambda n, t: (0, 0, 0)),   # weights
                   pl.BlockSpec((1, Cout), lambda n, t: (0, 0))]           # bias
            ),
            out_specs=pl.BlockSpec((None, THW, Cout), lambda n, t: (n, t, 0)),
        ),
        compiler_params=pltpu.CompilerParams(
            dimension_semantics=("parallel", "parallel"),
            vmem_limit_bytes=_vmem_limit_bytes(vmem_est),
        ),
        cost_estimate=pl.CostEstimate(
            flops=2 * N * Ho * Wo * 9 * Cin * Cout,
            transcendentals=0,
            bytes_accessed=hbm_bytes,
        ),
    )(*planes, w3, b2)

    return out.reshape(N, Ho, Wo, Cout)


def conv_tokenizer_forward(x_nchw, params):
    """Equivalent of ConvTokenizer.forward (norm_layer=None)."""
    x = jnp.transpose(x_nchw, (0, 2, 3, 1))                       # NCHW -> NHWC
    y = conv2d_s2_pallas(x, params["w1"], params["b1"])           # conv1
    z = conv2d_s2_pallas(y, params["w2"], params["b2"])           # conv2
    # PyTorch does .permute(0, 2, 3, 1) on the NCHW conv output -> NHWC.
    # z is already NHWC, so it is the final result.
    return z


# --------------------------- parameter init ----------------------------------


def init_params(key, in_chans, embed_dim):
    mid = embed_dim // 2
    k1, k2, k3, k4 = jax.random.split(key, 4)
    bound1 = 1.0 / jnp.sqrt(in_chans * 9.0)
    bound2 = 1.0 / jnp.sqrt(mid * 9.0)
    return {
        "w1": jax.random.uniform(k1, (mid, in_chans, 3, 3), jnp.float32,
                                 -bound1, bound1),
        "b1": jax.random.uniform(k2, (mid,), jnp.float32, -bound1, bound1),
        "w2": jax.random.uniform(k3, (embed_dim, mid, 3, 3), jnp.float32,
                                 -bound2, bound2),
        "b2": jax.random.uniform(k4, (embed_dim,), jnp.float32, -bound2, bound2),
    }


# ------------------------------ reference ------------------------------------


def ref_conv_tokenizer(x_nchw, params):
    def conv(x, w, b):
        y = lax.conv_general_dilated(
            x, w, window_strides=(2, 2), padding=((1, 1), (1, 1)),
            dimension_numbers=("NCHW", "OIHW", "NCHW"))
        return y + b[None, :, None, None]

    y = conv(x_nchw, params["w1"], params["b1"])
    z = conv(y, params["w2"], params["b2"])
    return jnp.transpose(z, (0, 2, 3, 1))


# --------------------------------- main ---------------------------------------


if __name__ == "__main__":
    key = jax.random.PRNGKey(0)
    kx, kp = jax.random.split(key)

    batch, in_chans, spatial, embed_dim = 2, 4, 16, 32
    x = jax.random.normal(kx, (batch, in_chans, spatial, spatial), jnp.float32)
    params = init_params(kp, in_chans, embed_dim)

    fwd = jax.jit(functools.partial(conv_tokenizer_forward, params=params))
    out = jax.block_until_ready(fwd(x))

    expected_shape = (batch, spatial // 4, spatial // 4, embed_dim)
    assert out.shape == expected_shape, (out.shape, expected_shape)

    ref = jax.block_until_ready(ref_conv_tokenizer(x, params))
    # bf16-streamed operands with f32 accumulation vs an all-f32 reference:
    # tolerance loosened accordingly (expected max |err| ~1e-2 at these shapes).
    assert jnp.allclose(out, ref, rtol=3e-2, atol=3e-2), \
        float(jnp.max(jnp.abs(out - ref)))

    print("KERNEL_OK")
</pallas_src>

<mosaic_0001>
module attributes {stable_mosaic.version = 11 : i64} {
  func.func @kernel(%arg0: i32, %arg1: i32, %arg2: memref<1x72x4xbf16, #tpu.memory_space<vmem>>, %arg3: memref<1x72x4xbf16, #tpu.memory_space<vmem>>, %arg4: memref<1x72x4xbf16, #tpu.memory_space<vmem>>, %arg5: memref<1x64x4xbf16, #tpu.memory_space<vmem>>, %arg6: memref<1x64x4xbf16, #tpu.memory_space<vmem>>, %arg7: memref<1x64x4xbf16, #tpu.memory_space<vmem>>, %arg8: memref<9x4x16xbf16, #tpu.memory_space<vmem>>, %arg9: memref<1x16xf32, #tpu.memory_space<vmem>>, %arg10: memref<1x64x16xf32, #tpu.memory_space<vmem>>) attributes {dimension_semantics = [#tpu.dimension_semantics<parallel>, #tpu.dimension_semantics<parallel>], iteration_bounds = array<i64: 2, 1>, scalar_prefetch = 0 : i64, scratch_operands = 0 : i64, tpu.core_type = #tpu.core_type<tc>, window_params = [{transform_indices = @transform_0, window_bounds = array<i64: 1, 72, 4>}, {transform_indices = @transform_1, window_bounds = array<i64: 1, 72, 4>}, {transform_indices = @transform_2, window_bounds = array<i64: 1, 72, 4>}, {transform_indices = @transform_3, window_bounds = array<i64: 1, 64, 4>}, {transform_indices = @transform_4, window_bounds = array<i64: 1, 64, 4>}, {transform_indices = @transform_5, window_bounds = array<i64: 1, 64, 4>}, {pipeline_mode = #tpu.pipeline_mode<synchronous>, transform_indices = @transform_6, window_bounds = array<i64: 9, 4, 16>}, {pipeline_mode = #tpu.pipeline_mode<synchronous>, transform_indices = @transform_7, window_bounds = array<i64: 1, 16>}, {transform_indices = @transform_8, window_bounds = array<i64: 1, 64, 16>}]} {
    %c0 = arith.constant 0 : index
    %c0_0 = arith.constant 0 : index
    %c0_1 = arith.constant 0 : index
    %0 = vector.load %arg2[%c0, %c0_0, %c0_1] : memref<1x72x4xbf16, #tpu.memory_space<vmem>>, vector<1x64x4xbf16>
    %1 = vector.shape_cast %0 : vector<1x64x4xbf16> to vector<64x4xbf16>
    %c0_2 = arith.constant 0 : index
    %c0_3 = arith.constant 0 : index
    %c0_4 = arith.constant 0 : index
    %2 = vector.load %arg8[%c0_2, %c0_3, %c0_4] : memref<9x4x16xbf16, #tpu.memory_space<vmem>>, vector<1x4x16xbf16>
    %3 = vector.shape_cast %2 : vector<1x4x16xbf16> to vector<4x16xbf16>
    %cst = arith.constant dense<0.000000e+00> : vector<64x16xf32>
    %4 = tpu.matmul %1, %3, %cst {dimension_numbers = #tpu.dot_dimension_numbers<[1], [0], [0], [1], [0, 0, 1, 1], [], []>} : vector<64x4xbf16>, vector<4x16xbf16>, vector<64x16xf32> -> vector<64x16xf32>
    %c0_5 = arith.constant 0 : index
    %c0_6 = arith.constant 0 : index
    %c0_7 = arith.constant 0 : index
    %5 = vector.load %arg3[%c0_5, %c0_6, %c0_7] : memref<1x72x4xbf16, #tpu.memory_space<vmem>>, vector<1x64x4xbf16>
    %6 = vector.shape_cast %5 : vector<1x64x4xbf16> to vector<64x4xbf16>
    %c1 = arith.constant 1 : index
    %c0_8 = arith.constant 0 : index
    %c0_9 = arith.constant 0 : index
    %7 = vector.load %arg8[%c1, %c0_8, %c0_9] : memref<9x4x16xbf16, #tpu.memory_space<vmem>>, vector<1x4x16xbf16>
    %8 = vector.shape_cast %7 : vector<1x4x16xbf16> to vector<4x16xbf16>
    %cst_10 = arith.constant dense<0.000000e+00> : vector<64x16xf32>
    %9 = tpu.matmul %6, %8, %cst_10 {dimension_numbers = #tpu.dot_dimension_numbers<[1], [0], [0], [1], [0, 0, 1, 1], [], []>} : vector<64x4xbf16>, vector<4x16xbf16>, vector<64x16xf32> -> vector<64x16xf32>
    %10 = arith.addf %4, %9 : vector<64x16xf32>
    %c0_11 = arith.constant 0 : index
    %c0_12 = arith.constant 0 : index
    %c0_13 = arith.constant 0 : index
    %11 = vector.load %arg4[%c0_11, %c0_12, %c0_13] : memref<1x72x4xbf16, #tpu.memory_space<vmem>>, vector<1x64x4xbf16>
    %12 = vector.shape_cast %11 : vector<1x64x4xbf16> to vector<64x4xbf16>
    %c2 = arith.constant 2 : index
    %c0_14 = arith.constant 0 : index
    %c0_15 = arith.constant 0 : index
    %13 = vector.load %arg8[%c2, %c0_14, %c0_15] : memref<9x4x16xbf16, #tpu.memory_space<vmem>>, vector<1x4x16xbf16>
    %14 = vector.shape_cast %13 : vector<1x4x16xbf16> to vector<4x16xbf16>
    %cst_16 = arith.constant dense<0.000000e+00> : vector<64x16xf32>
    %15 = tpu.matmul %12, %14, %cst_16 {dimension_numbers = #tpu.dot_dimension_numbers<[1], [0], [0], [1], [0, 0, 1, 1], [], []>} : vector<64x4xbf16>, vector<4x16xbf16>, vector<64x16xf32> -> vector<64x16xf32>
    %16 = arith.addf %10, %15 : vector<64x16xf32>
    %c0_17 = arith.constant 0 : index
    %c0_18 = arith.constant 0 : index
    %c0_19 = arith.constant 0 : index
    %17 = vector.load %arg5[%c0_17, %c0_18, %c0_19] : memref<1x64x4xbf16, #tpu.memory_space<vmem>>, vector<1x64x4xbf16>
    %18 = vector.shape_cast %17 : vector<1x64x4xbf16> to vector<64x4xbf16>
    %c3 = arith.constant 3 : index
    %c0_20 = arith.constant 0 : index
    %c0_21 = arith.constant 0 : index
    %19 = vector.load %arg8[%c3, %c0_20, %c0_21] : memref<9x4x16xbf16, #tpu.memory_space<vmem>>, vector<1x4x16xbf16>
    %20 = vector.shape_cast %19 : vector<1x4x16xbf16> to vector<4x16xbf16>
    %cst_22 = arith.constant dense<0.000000e+00> : vector<64x16xf32>
    %21 = tpu.matmul %18, %20, %cst_22 {dimension_numbers = #tpu.dot_dimension_numbers<[1], [0], [0], [1], [0, 0, 1, 1], [], []>} : vector<64x4xbf16>, vector<4x16xbf16>, vector<64x16xf32> -> vector<64x16xf32>
    %22 = arith.addf %16, %21 : vector<64x16xf32>
    %c0_23 = arith.constant 0 : index
    %c0_24 = arith.constant 0 : index
    %c0_25 = arith.constant 0 : index
    %23 = vector.load %arg6[%c0_23, %c0_24, %c0_25] : memref<1x64x4xbf16, #tpu.memory_space<vmem>>, vector<1x64x4xbf16>
    %24 = vector.shape_cast %23 : vector<1x64x4xbf16> to vector<64x4xbf16>
    %c4 = arith.constant 4 : index
    %c0_26 = arith.constant 0 : index
    %c0_27 = arith.constant 0 : index
    %25 = vector.load %arg8[%c4, %c0_26, %c0_27] : memref<9x4x16xbf16, #tpu.memory_space<vmem>>, vector<1x4x16xbf16>
    %26 = vector.shape_cast %25 : vector<1x4x16xbf16> to vector<4x16xbf16>
    %cst_28 = arith.constant dense<0.000000e+00> : vector<64x16xf32>
    %27 = tpu.matmul %24, %26, %cst_28 {dimension_numbers = #tpu.dot_dimension_numbers<[1], [0], [0], [1], [0, 0, 1, 1], [], []>} : vector<64x4xbf16>, vector<4x16xbf16>, vector<64x16xf32> -> vector<64x16xf32>
    %28 = arith.addf %22, %27 : vector<64x16xf32>
    %c0_29 = arith.constant 0 : index
    %c0_30 = arith.constant 0 : index
    %c0_31 = arith.constant 0 : index
    %29 = vector.load %arg7[%c0_29, %c0_30, %c0_31] : memref<1x64x4xbf16, #tpu.memory_space<vmem>>, vector<1x64x4xbf16>
    %30 = vector.shape_cast %29 : vector<1x64x4xbf16> to vector<64x4xbf16>
    %c5 = arith.constant 5 : index
    %c0_32 = arith.constant 0 : index
    %c0_33 = arith.constant 0 : index
    %31 = vector.load %arg8[%c5, %c0_32, %c0_33] : memref<9x4x16xbf16, #tpu.memory_space<vmem>>, vector<1x4x16xbf16>
    %32 = vector.shape_cast %31 : vector<1x4x16xbf16> to vector<4x16xbf16>
    %cst_34 = arith.constant dense<0.000000e+00> : vector<64x16xf32>
    %33 = tpu.matmul %30, %32, %cst_34 {dimension_numbers = #tpu.dot_dimension_numbers<[1], [0], [0], [1], [0, 0, 1, 1], [], []>} : vector<64x4xbf16>, vector<4x16xbf16>, vector<64x16xf32> -> vector<64x16xf32>
    %34 = arith.addf %28, %33 : vector<64x16xf32>
    %c0_35 = arith.constant 0 : index
    %c8 = arith.constant 8 : index
    %c0_36 = arith.constant 0 : index
    %35 = vector.load %arg2[%c0_35, %c8, %c0_36] : memref<1x72x4xbf16, #tpu.memory_space<vmem>>, vector<1x64x4xbf16>
    %36 = vector.shape_cast %35 : vector<1x64x4xbf16> to vector<64x4xbf16>
    %c6 = arith.constant 6 : index
    %c0_37 = arith.constant 0 : index
    %c0_38 = arith.constant 0 : index
    %37 = vector.load %arg8[%c6, %c0_37, %c0_38] : memref<9x4x16xbf16, #tpu.memory_space<vmem>>, vector<1x4x16xbf16>
    %38 = vector.shape_cast %37 : vector<1x4x16xbf16> to vector<4x16xbf16>
    %cst_39 = arith.constant dense<0.000000e+00> : vector<64x16xf32>
    %39 = tpu.matmul %36, %38, %cst_39 {dimension_numbers = #tpu.dot_dimension_numbers<[1], [0], [0], [1], [0, 0, 1, 1], [], []>} : vector<64x4xbf16>, vector<4x16xbf16>, vector<64x16xf32> -> vector<64x16xf32>
    %40 = arith.addf %34, %39 : vector<64x16xf32>
    %c0_40 = arith.constant 0 : index
    %c8_41 = arith.constant 8 : index
    %c0_42 = arith.constant 0 : index
    %41 = vector.load %arg3[%c0_40, %c8_41, %c0_42] : memref<1x72x4xbf16, #tpu.memory_space<vmem>>, vector<1x64x4xbf16>
    %42 = vector.shape_cast %41 : vector<1x64x4xbf16> to vector<64x4xbf16>
    %c7 = arith.constant 7 : index
    %c0_43 = arith.constant 0 : index
    %c0_44 = arith.constant 0 : index
    %43 = vector.load %arg8[%c7, %c0_43, %c0_44] : memref<9x4x16xbf16, #tpu.memory_space<vmem>>, vector<1x4x16xbf16>
    %44 = vector.shape_cast %43 : vector<1x4x16xbf16> to vector<4x16xbf16>
    %cst_45 = arith.constant dense<0.000000e+00> : vector<64x16xf32>
    %45 = tpu.matmul %42, %44, %cst_45 {dimension_numbers = #tpu.dot_dimension_numbers<[1], [0], [0], [1], [0, 0, 1, 1], [], []>} : vector<64x4xbf16>, vector<4x16xbf16>, vector<64x16xf32> -> vector<64x16xf32>
    %46 = arith.addf %40, %45 : vector<64x16xf32>
    %c0_46 = arith.constant 0 : index
    %c8_47 = arith.constant 8 : index
    %c0_48 = arith.constant 0 : index
    %47 = vector.load %arg4[%c0_46, %c8_47, %c0_48] : memref<1x72x4xbf16, #tpu.memory_space<vmem>>, vector<1x64x4xbf16>
    %48 = vector.shape_cast %47 : vector<1x64x4xbf16> to vector<64x4xbf16>
    %c8_49 = arith.constant 8 : index
    %c0_50 = arith.constant 0 : index
    %c0_51 = arith.constant 0 : index
    %49 = vector.load %arg8[%c8_49, %c0_50, %c0_51] : memref<9x4x16xbf16, #tpu.memory_space<vmem>>, vector<1x4x16xbf16>
    %50 = vector.shape_cast %49 : vector<1x4x16xbf16> to vector<4x16xbf16>
    %cst_52 = arith.constant dense<0.000000e+00> : vector<64x16xf32>
    %51 = tpu.matmul %48, %50, %cst_52 {dimension_numbers = #tpu.dot_dimension_numbers<[1], [0], [0], [1], [0, 0, 1, 1], [], []>} : vector<64x4xbf16>, vector<4x16xbf16>, vector<64x16xf32> -> vector<64x16xf32>
    %52 = arith.addf %46, %51 : vector<64x16xf32>
    %c0_53 = arith.constant 0 : index
    %c0_54 = arith.constant 0 : index
    %53 = vector.load %arg9[%c0_53, %c0_54] : memref<1x16xf32, #tpu.memory_space<vmem>>, vector<1x16xf32>
    %54 = vector.broadcast %53 : vector<1x16xf32> to vector<64x16xf32>
    %55 = arith.addf %52, %54 : vector<64x16xf32>
    %c0_55 = arith.constant 0 : index
    %c0_56 = arith.constant 0 : index
    %c0_57 = arith.constant 0 : index
    %56 = vector.load %arg10[%c0_55, %c0_56, %c0_57] : memref<1x64x16xf32, #tpu.memory_space<vmem>>, vector<1x64x16xf32>
    %57 = vector.shape_cast %56 : vector<1x64x16xf32> to vector<64x16xf32>
    %58 = vector.shape_cast %55 : vector<64x16xf32> to vector<1x64x16xf32>
    tpu.vector_store %arg10[%c0_55, %c0_56, %c0_57], %58 {strides = array<i32>} : memref<1x64x16xf32, #tpu.memory_space<vmem>>, vector<1x64x16xf32>,
    return
  }
  func.func @transform_0(%arg0: i32, %arg1: i32) -> (i32, i32, i32) {
    %c0_i32 = arith.constant 0 : i32
    %c0_i32_0 = arith.constant 0 : i32
    %c0_i32_1 = arith.constant 0 : i32
    return %arg0, %c0_i32, %c0_i32_0 : i32, i32, i32
  }
  func.func @transform_1(%arg0: i32, %arg1: i32) -> (i32, i32, i32) {
    %c0_i32 = arith.constant 0 : i32
    %c0_i32_0 = arith.constant 0 : i32
    %c0_i32_1 = arith.constant 0 : i32
    return %arg0, %c0_i32, %c0_i32_0 : i32, i32, i32
  }
  func.func @transform_2(%arg0: i32, %arg1: i32) -> (i32, i32, i32) {
    %c0_i32 = arith.constant 0 : i32
    %c0_i32_0 = arith.constant 0 : i32
    %c0_i32_1 = arith.constant 0 : i32
    return %arg0, %c0_i32, %c0_i32_0 : i32, i32, i32
  }
  func.func @transform_3(%arg0: i32, %arg1: i32) -> (i32, i32, i32) {
    %c0_i32 = arith.constant 0 : i32
    %c0_i32_0 = arith.constant 0 : i32
    %c0_i32_1 = arith.constant 0 : i32
    return %arg0, %c0_i32, %c0_i32_0 : i32, i32, i32
  }
  func.func @transform_4(%arg0: i32, %arg1: i32) -> (i32, i32, i32) {
    %c0_i32 = arith.constant 0 : i32
    %c0_i32_0 = arith.constant 0 : i32
    %c0_i32_1 = arith.constant 0 : i32
    return %arg0, %c0_i32, %c0_i32_0 : i32, i32, i32
  }
  func.func @transform_5(%arg0: i32, %arg1: i32) -> (i32, i32, i32) {
    %c0_i32 = arith.constant 0 : i32
    %c0_i32_0 = arith.constant 0 : i32
    %c0_i32_1 = arith.constant 0 : i32
    return %arg0, %c0_i32, %c0_i32_0 : i32, i32, i32
  }
  func.func @transform_6(%arg0: i32, %arg1: i32) -> (i32, i32, i32) {
    %c0_i32 = arith.constant 0 : i32
    %c0_i32_0 = arith.constant 0 : i32
    %c0_i32_1 = arith.constant 0 : i32
    %c0_i32_2 = arith.constant 0 : i32
    return %c0_i32, %c0_i32_0, %c0_i32_1 : i32, i32, i32
  }
  func.func @transform_7(%arg0: i32, %arg1: i32) -> (i32, i32) {
    %c0_i32 = arith.constant 0 : i32
    %c0_i32_0 = arith.constant 0 : i32
    %c0_i32_1 = arith.constant 0 : i32
    return %c0_i32, %c0_i32_0 : i32, i32
  }
  func.func @transform_8(%arg0: i32, %arg1: i32) -> (i32, i32, i32) {
    %c0_i32 = arith.constant 0 : i32
    %c0_i32_0 = arith.constant 0 : i32
    return %arg0, %arg1, %c0_i32 : i32, i32, i32
  }
}

module attributes {stable_mosaic.version = 11 : i64} {
  func.func @kernel(%arg0: i32, %arg1: i32, %arg2: memref<1x20x16xbf16, #tpu.memory_space<vmem>>, %arg3: memref<1x20x16xbf16, #tpu.memory_space<vmem>>, %arg4: memref<1x20x16xbf16, #tpu.memory_space<vmem>>, %arg5: memref<1x16x16xbf16, #tpu.memory_space<vmem>>, %arg6: memref<1x16x16xbf16, #tpu.memory_space<vmem>>, %arg7: memref<1x16x16xbf16, #tpu.memory_space<vmem>>, %arg8: memref<9x16x32xbf16, #tpu.memory_space<vmem>>, %arg9: memref<1x32xf32, #tpu.memory_space<vmem>>, %arg10: memref<1x16x32xf32, #tpu.memory_space<vmem>>) attributes {dimension_semantics = [#tpu.dimension_semantics<parallel>, #tpu.dimension_semantics<parallel>], iteration_bounds = array<i64: 2, 1>, scalar_prefetch = 0 : i64, scratch_operands = 0 : i64, tpu.core_type = #tpu.core_type<tc>, window_params = [{transform_indices = @transform_0, window_bounds = array<i64: 1, 20, 16>}, {transform_indices = @transform_1, window_bounds = array<i64: 1, 20, 16>}, {transform_indices = @transform_2, window_bounds = array<i64: 1, 20, 16>}, {transform_indices = @transform_3, window_bounds = array<i64: 1, 16, 16>}, {transform_indices = @transform_4, window_bounds = array<i64: 1, 16, 16>}, {transform_indices = @transform_5, window_bounds = array<i64: 1, 16, 16>}, {pipeline_mode = #tpu.pipeline_mode<synchronous>, transform_indices = @transform_6, window_bounds = array<i64: 9, 16, 32>}, {pipeline_mode = #tpu.pipeline_mode<synchronous>, transform_indices = @transform_7, window_bounds = array<i64: 1, 32>}, {transform_indices = @transform_8, window_bounds = array<i64: 1, 16, 32>}]} {
    %c0 = arith.constant 0 : index
    %c0_0 = arith.constant 0 : index
    %c0_1 = arith.constant 0 : index
    %0 = vector.load %arg2[%c0, %c0_0, %c0_1] : memref<1x20x16xbf16, #tpu.memory_space<vmem>>, vector<1x16x16xbf16>
    %1 = vector.shape_cast %0 : vector<1x16x16xbf16> to vector<16x16xbf16>
    %c0_2 = arith.constant 0 : index
    %c0_3 = arith.constant 0 : index
    %c0_4 = arith.constant 0 : index
    %2 = vector.load %arg8[%c0_2, %c0_3, %c0_4] : memref<9x16x32xbf16, #tpu.memory_space<vmem>>, vector<1x16x32xbf16>
    %3 = vector.shape_cast %2 : vector<1x16x32xbf16> to vector<16x32xbf16>
    %cst = arith.constant dense<0.000000e+00> : vector<16x32xf32>
    %4 = tpu.matmul %1, %3, %cst {dimension_numbers = #tpu.dot_dimension_numbers<[1], [0], [0], [1], [0, 0, 1, 1], [], []>} : vector<16x16xbf16>, vector<16x32xbf16>, vector<16x32xf32> -> vector<16x32xf32>
    %c0_5 = arith.constant 0 : index
    %c0_6 = arith.constant 0 : index
    %c0_7 = arith.constant 0 : index
    %5 = vector.load %arg3[%c0_5, %c0_6, %c0_7] : memref<1x20x16xbf16, #tpu.memory_space<vmem>>, vector<1x16x16xbf16>
    %6 = vector.shape_cast %5 : vector<1x16x16xbf16> to vector<16x16xbf16>
    %c1 = arith.constant 1 : index
    %c0_8 = arith.constant 0 : index
    %c0_9 = arith.constant 0 : index
    %7 = vector.load %arg8[%c1, %c0_8, %c0_9] : memref<9x16x32xbf16, #tpu.memory_space<vmem>>, vector<1x16x32xbf16>
    %8 = vector.shape_cast %7 : vector<1x16x32xbf16> to vector<16x32xbf16>
    %cst_10 = arith.constant dense<0.000000e+00> : vector<16x32xf32>
    %9 = tpu.matmul %6, %8, %cst_10 {dimension_numbers = #tpu.dot_dimension_numbers<[1], [0], [0], [1], [0, 0, 1, 1], [], []>} : vector<16x16xbf16>, vector<16x32xbf16>, vector<16x32xf32> -> vector<16x32xf32>
    %10 = arith.addf %4, %9 : vector<16x32xf32>
    %c0_11 = arith.constant 0 : index
    %c0_12 = arith.constant 0 : index
    %c0_13 = arith.constant 0 : index
    %11 = vector.load %arg4[%c0_11, %c0_12, %c0_13] : memref<1x20x16xbf16, #tpu.memory_space<vmem>>, vector<1x16x16xbf16>
    %12 = vector.shape_cast %11 : vector<1x16x16xbf16> to vector<16x16xbf16>
    %c2 = arith.constant 2 : index
    %c0_14 = arith.constant 0 : index
    %c0_15 = arith.constant 0 : index
    %13 = vector.load %arg8[%c2, %c0_14, %c0_15] : memref<9x16x32xbf16, #tpu.memory_space<vmem>>, vector<1x16x32xbf16>
    %14 = vector.shape_cast %13 : vector<1x16x32xbf16> to vector<16x32xbf16>
    %cst_16 = arith.constant dense<0.000000e+00> : vector<16x32xf32>
    %15 = tpu.matmul %12, %14, %cst_16 {dimension_numbers = #tpu.dot_dimension_numbers<[1], [0], [0], [1], [0, 0, 1, 1], [], []>} : vector<16x16xbf16>, vector<16x32xbf16>, vector<16x32xf32> -> vector<16x32xf32>
    %16 = arith.addf %10, %15 : vector<16x32xf32>
    %c0_17 = arith.constant 0 : index
    %c0_18 = arith.constant 0 : index
    %c0_19 = arith.constant 0 : index
    %17 = vector.load %arg5[%c0_17, %c0_18, %c0_19] : memref<1x16x16xbf16, #tpu.memory_space<vmem>>, vector<1x16x16xbf16>
    %18 = vector.shape_cast %17 : vector<1x16x16xbf16> to vector<16x16xbf16>
    %c3 = arith.constant 3 : index
    %c0_20 = arith.constant 0 : index
    %c0_21 = arith.constant 0 : index
    %19 = vector.load %arg8[%c3, %c0_20, %c0_21] : memref<9x16x32xbf16, #tpu.memory_space<vmem>>, vector<1x16x32xbf16>
    %20 = vector.shape_cast %19 : vector<1x16x32xbf16> to vector<16x32xbf16>
    %cst_22 = arith.constant dense<0.000000e+00> : vector<16x32xf32>
    %21 = tpu.matmul %18, %20, %cst_22 {dimension_numbers = #tpu.dot_dimension_numbers<[1], [0], [0], [1], [0, 0, 1, 1], [], []>} : vector<16x16xbf16>, vector<16x32xbf16>, vector<16x32xf32> -> vector<16x32xf32>
    %22 = arith.addf %16, %21 : vector<16x32xf32>
    %c0_23 = arith.constant 0 : index
    %c0_24 = arith.constant 0 : index
    %c0_25 = arith.constant 0 : index
    %23 = vector.load %arg6[%c0_23, %c0_24, %c0_25] : memref<1x16x16xbf16, #tpu.memory_space<vmem>>, vector<1x16x16xbf16>
    %24 = vector.shape_cast %23 : vector<1x16x16xbf16> to vector<16x16xbf16>
    %c4 = arith.constant 4 : index
    %c0_26 = arith.constant 0 : index
    %c0_27 = arith.constant 0 : index
    %25 = vector.load %arg8[%c4, %c0_26, %c0_27] : memref<9x16x32xbf16, #tpu.memory_space<vmem>>, vector<1x16x32xbf16>
    %26 = vector.shape_cast %25 : vector<1x16x32xbf16> to vector<16x32xbf16>
    %cst_28 = arith.constant dense<0.000000e+00> : vector<16x32xf32>
    %27 = tpu.matmul %24, %26, %cst_28 {dimension_numbers = #tpu.dot_dimension_numbers<[1], [0], [0], [1], [0, 0, 1, 1], [], []>} : vector<16x16xbf16>, vector<16x32xbf16>, vector<16x32xf32> -> vector<16x32xf32>
    %28 = arith.addf %22, %27 : vector<16x32xf32>
    %c0_29 = arith.constant 0 : index
    %c0_30 = arith.constant 0 : index
    %c0_31 = arith.constant 0 : index
    %29 = vector.load %arg7[%c0_29, %c0_30, %c0_31] : memref<1x16x16xbf16, #tpu.memory_space<vmem>>, vector<1x16x16xbf16>
    %30 = vector.shape_cast %29 : vector<1x16x16xbf16> to vector<16x16xbf16>
    %c5 = arith.constant 5 : index
    %c0_32 = arith.constant 0 : index
    %c0_33 = arith.constant 0 : index
    %31 = vector.load %arg8[%c5, %c0_32, %c0_33] : memref<9x16x32xbf16, #tpu.memory_space<vmem>>, vector<1x16x32xbf16>
    %32 = vector.shape_cast %31 : vector<1x16x32xbf16> to vector<16x32xbf16>
    %cst_34 = arith.constant dense<0.000000e+00> : vector<16x32xf32>
    %33 = tpu.matmul %30, %32, %cst_34 {dimension_numbers = #tpu.dot_dimension_numbers<[1], [0], [0], [1], [0, 0, 1, 1], [], []>} : vector<16x16xbf16>, vector<16x32xbf16>, vector<16x32xf32> -> vector<16x32xf32>
    %34 = arith.addf %28, %33 : vector<16x32xf32>
    %c0_35 = arith.constant 0 : index
    %c4_36 = arith.constant 4 : index
    %c0_37 = arith.constant 0 : index
    %35 = vector.load %arg2[%c0_35, %c4_36, %c0_37] : memref<1x20x16xbf16, #tpu.memory_space<vmem>>, vector<1x16x16xbf16>
    %36 = vector.shape_cast %35 : vector<1x16x16xbf16> to vector<16x16xbf16>
    %c6 = arith.constant 6 : index
    %c0_38 = arith.constant 0 : index
    %c0_39 = arith.constant 0 : index
    %37 = vector.load %arg8[%c6, %c0_38, %c0_39] : memref<9x16x32xbf16, #tpu.memory_space<vmem>>, vector<1x16x32xbf16>
    %38 = vector.shape_cast %37 : vector<1x16x32xbf16> to vector<16x32xbf16>
    %cst_40 = arith.constant dense<0.000000e+00> : vector<16x32xf32>
    %39 = tpu.matmul %36, %38, %cst_40 {dimension_numbers = #tpu.dot_dimension_numbers<[1], [0], [0], [1], [0, 0, 1, 1], [], []>} : vector<16x16xbf16>, vector<16x32xbf16>, vector<16x32xf32> -> vector<16x32xf32>
    %40 = arith.addf %34, %39 : vector<16x32xf32>
    %c0_41 = arith.constant 0 : index
    %c4_42 = arith.constant 4 : index
    %c0_43 = arith.constant 0 : index
    %41 = vector.load %arg3[%c0_41, %c4_42, %c0_43] : memref<1x20x16xbf16, #tpu.memory_space<vmem>>, vector<1x16x16xbf16>
    %42 = vector.shape_cast %41 : vector<1x16x16xbf16> to vector<16x16xbf16>
    %c7 = arith.constant 7 : index
    %c0_44 = arith.constant 0 : index
    %c0_45 = arith.constant 0 : index
    %43 = vector.load %arg8[%c7, %c0_44, %c0_45] : memref<9x16x32xbf16, #tpu.memory_space<vmem>>, vector<1x16x32xbf16>
    %44 = vector.shape_cast %43 : vector<1x16x32xbf16> to vector<16x32xbf16>
    %cst_46 = arith.constant dense<0.000000e+00> : vector<16x32xf32>
    %45 = tpu.matmul %42, %44, %cst_46 {dimension_numbers = #tpu.dot_dimension_numbers<[1], [0], [0], [1], [0, 0, 1, 1], [], []>} : vector<16x16xbf16>, vector<16x32xbf16>, vector<16x32xf32> -> vector<16x32xf32>
    %46 = arith.addf %40, %45 : vector<16x32xf32>
    %c0_47 = arith.constant 0 : index
    %c4_48 = arith.constant 4 : index
    %c0_49 = arith.constant 0 : index
    %47 = vector.load %arg4[%c0_47, %c4_48, %c0_49] : memref<1x20x16xbf16, #tpu.memory_space<vmem>>, vector<1x16x16xbf16>
    %48 = vector.shape_cast %47 : vector<1x16x16xbf16> to vector<16x16xbf16>
    %c8 = arith.constant 8 : index
    %c0_50 = arith.constant 0 : index
    %c0_51 = arith.constant 0 : index
    %49 = vector.load %arg8[%c8, %c0_50, %c0_51] : memref<9x16x32xbf16, #tpu.memory_space<vmem>>, vector<1x16x32xbf16>
    %50 = vector.shape_cast %49 : vector<1x16x32xbf16> to vector<16x32xbf16>
    %cst_52 = arith.constant dense<0.000000e+00> : vector<16x32xf32>
    %51 = tpu.matmul %48, %50, %cst_52 {dimension_numbers = #tpu.dot_dimension_numbers<[1], [0], [0], [1], [0, 0, 1, 1], [], []>} : vector<16x16xbf16>, vector<16x32xbf16>, vector<16x32xf32> -> vector<16x32xf32>
    %52 = arith.addf %46, %51 : vector<16x32xf32>
    %c0_53 = arith.constant 0 : index
    %c0_54 = arith.constant 0 : index
    %53 = vector.load %arg9[%c0_53, %c0_54] : memref<1x32xf32, #tpu.memory_space<vmem>>, vector<1x32xf32>
    %54 = vector.broadcast %53 : vector<1x32xf32> to vector<16x32xf32>
    %55 = arith.addf %52, %54 : vector<16x32xf32>
    %c0_55 = arith.constant 0 : index
    %c0_56 = arith.constant 0 : index
    %c0_57 = arith.constant 0 : index
    %56 = vector.load %arg10[%c0_55, %c0_56, %c0_57] : memref<1x16x32xf32, #tpu.memory_space<vmem>>, vector<1x16x32xf32>
    %57 = vector.shape_cast %56 : vector<1x16x32xf32> to vector<16x32xf32>
    %58 = vector.shape_cast %55 : vector<16x32xf32> to vector<1x16x32xf32>
    tpu.vector_store %arg10[%c0_55, %c0_56, %c0_57], %58 {strides = array<i32>} : memref<1x16x32xf32, #tpu.memory_space<vmem>>, vector<1x16x32xf32>,
    return
  }
  func.func @transform_0(%arg0: i32, %arg1: i32) -> (i32, i32, i32) {
    %c0_i32 = arith.constant 0 : i32
    %c0_i32_0 = arith.constant 0 : i32
    %c0_i32_1 = arith.constant 0 : i32
    return %arg0, %c0_i32, %c0_i32_0 : i32, i32, i32
  }
  func.func @transform_1(%arg0: i32, %arg1: i32) -> (i32, i32, i32) {
    %c0_i32 = arith.constant 0 : i32
    %c0_i32_0 = arith.constant 0 : i32
    %c0_i32_1 = arith.constant 0 : i32
    return %arg0, %c0_i32, %c0_i32_0 : i32, i32, i32
  }
  func.func @transform_2(%arg0: i32, %arg1: i32) -> (i32, i32, i32) {
    %c0_i32 = arith.constant 0 : i32
    %c0_i32_0 = arith.constant 0 : i32
    %c0_i32_1 = arith.constant 0 : i32
    return %arg0, %c0_i32, %c0_i32_0 : i32, i32, i32
  }
  func.func @transform_3(%arg0: i32, %arg1: i32) -> (i32, i32, i32) {
    %c0_i32 = arith.constant 0 : i32
    %c0_i32_0 = arith.constant 0 : i32
    %c0_i32_1 = arith.constant 0 : i32
    return %arg0, %c0_i32, %c0_i32_0 : i32, i32, i32
  }
  func.func @transform_4(%arg0: i32, %arg1: i32) -> (i32, i32, i32) {
    %c0_i32 = arith.constant 0 : i32
    %c0_i32_0 = arith.constant 0 : i32
    %c0_i32_1 = arith.constant 0 : i32
    return %arg0, %c0_i32, %c0_i32_0 : i32, i32, i32
  }
  func.func @transform_5(%arg0: i32, %arg1: i32) -> (i32, i32, i32) {
    %c0_i32 = arith.constant 0 : i32
    %c0_i32_0 = arith.constant 0 : i32
    %c0_i32_1 = arith.constant 0 : i32
    return %arg0, %c0_i32, %c0_i32_0 : i32, i32, i32
  }
  func.func @transform_6(%arg0: i32, %arg1: i32) -> (i32, i32, i32) {
    %c0_i32 = arith.constant 0 : i32
    %c0_i32_0 = arith.constant 0 : i32
    %c0_i32_1 = arith.constant 0 : i32
    %c0_i32_2 = arith.constant 0 : i32
    return %c0_i32, %c0_i32_0, %c0_i32_1 : i32, i32, i32
  }
  func.func @transform_7(%arg0: i32, %arg1: i32) -> (i32, i32) {
    %c0_i32 = arith.constant 0 : i32
    %c0_i32_0 = arith.constant 0 : i32
    %c0_i32_1 = arith.constant 0 : i32
    return %c0_i32, %c0_i32_0 : i32, i32
  }
  func.func @transform_8(%arg0: i32, %arg1: i32) -> (i32, i32, i32) {
    %c0_i32 = arith.constant 0 : i32
    %c0_i32_0 = arith.constant 0 : i32
    return %arg0, %arg1, %c0_i32 : i32, i32, i32
  }
}

</mosaic_0001>

<llo_original>
// kernel: conv_tokenizer_forward.2
$region0: #{conv_tokenizer_forward.2}
  #allocation0 [shape = 'u32[]', space=smem, size = 0x4, offset = 0x4, fixed_abs, tag = 'smem constant byte address 0x4 - core index']
  #allocation1 [shape = 'u32[144,128]{1,0:T(1,128)}', space=vmem, size = 0x12000, scoped, tag = 'internal scratch']
  %s0 = inlined_call_operand.vmem [shape: bf16[2,72,4], index: 0, kind: input, shape index: {}]
  %s1 = inlined_call_operand.vmem [shape: bf16[2,72,4], index: 1, kind: input, shape index: {}]
  %s2 = inlined_call_operand.vmem [shape: bf16[2,72,4], index: 2, kind: input, shape index: {}]
  %s3 = inlined_call_operand.vmem [shape: bf16[2,64,4], index: 3, kind: input, shape index: {}]
  %s4 = inlined_call_operand.vmem [shape: bf16[2,64,4], index: 4, kind: input, shape index: {}]
  %s5 = inlined_call_operand.vmem [shape: bf16[2,64,4], index: 5, kind: input, shape index: {}]
  %s6 = inlined_call_operand.vmem [shape: bf16[9,4,16], index: 6, kind: input, shape index: {}]
  %s7 = inlined_call_operand.vmem [shape: f32[1,16], index: 7, kind: input, shape index: {}]
  %s8 = inlined_call_operand.vmem [shape: f32[2,64,16], index: 8, kind: output, shape index: {}]
  %s9 = sld [smem:[#allocation0]]
  $region65: #{conv_tokenizer_forward.2} parent=0
    _
  %s11 = ssub.s32 1, %s9
  %s12 = scalar_select 0, %s11, %s9
  loop: start=0, step=1, limit=4
  $region2: #{conv_tokenizer_forward.2} parent=0 // loop_pre_header
    _
  $region3: #{conv_tokenizer_forward.2} parent=0 // loop_header
    %s14 = sphi 0, %s18
    %p15 = scmp.ge.s32.totalorder %s14, 4
    %s21 = sphi 0, %s33
    %s22 = sphi 0, %s29
    %s23 = sphi 0, %s21
    %s24 = sphi 0, %s22
    %s25 = sphi 0, %s23
    %s26 = sphi 0, %s24
    %s36 = sphi 0, %s38
    %s39 = sphi 0, %s36
    %s40 = sphi 0, %s39
    %s56 = sphi 0, %s40
    %s62 = sphi 0, %s64
    %s65 = sphi 0, %s62
    %s66 = sphi 0, %s65
    %s82 = sphi 0, %s66
    %s88 = sphi 0, %s90
    %s91 = sphi 0, %s88
    %s92 = sphi 0, %s91
    %s108 = sphi 0, %s92
    %s114 = sphi 0, %s116
    %s117 = sphi 0, %s114
    %s118 = sphi 0, %s117
    %s134 = sphi 0, %s118
    %s140 = sphi 0, %s142
    %s143 = sphi 0, %s140
    %s144 = sphi 0, %s143
    %s160 = sphi 0, %s144
    %s166 = sphi 0, %s168
    %s169 = sphi 0, %s166
    %s170 = sphi 0, %s169
    %s186 = sphi 0, %s170
    %s190 = sphi 0, %s190
    %s192 = sphi 0, %s190
    %s193 = sphi 0, %s192
    %s207 = sphi 0, %s193
    %s211 = sphi 0, %s211
    %s213 = sphi 0, %s211
    %s214 = sphi 0, %s213
    %s228 = sphi 0, %s214
    %s236 = sphi 0, %s238
    %s239 = sphi 0, %s236
    %s240 = sphi 0, %s239
    %s256 = sphi 0, %s240
  $region4: #{conv_tokenizer_forward.2} parent=0 // loop_header_branch
    %17 = sbr.rel (%p15) target = $region8
  $region5: #{conv_tokenizer_forward.2} parent=0 // loop_body
    %s19 = ssub.s32 %s14, 1
    %s20 = ssub.s32 %s14, 2
    %s27 = sadd.s32 1, %s22
    %p28 = scmp.ge.s32.totalorder %s27, 1
    %s29 = scalar_select %p28, 0, %s27
    %s30 = sadd.s32 1, %s21
    %s31 = scalar_select %p28, %s30, %s21
    %p32 = scmp.ge.s32.totalorder %s31, 2
    %s33 = scalar_select %p32, 0, %s31
    %s34 = ssub.s32 %s21, %s33
    %p35 = scmp.eq.s32.totalorder %s34, 0
    %s37 = sadd.s32 %s36, 1
    %s38 = scalar_select %p35, %s36, %s37
    %p41 = pneg %p35
    %p42 = scmp.eq.s32.totalorder %s14, 1
    %p43 = por %p41, %p42
    %p44 = scmp.ne.s32.totalorder %s36, %s39
    %p45 = scmp.eq.s32.totalorder %s14, 0
    %p46 = por %p44, %p45
    %p47 = scmp.ne.s32.totalorder %s36, %s39
    %p48 = scmp.eq.s32.totalorder %s19, 1
    %p49 = por %p47, %p48
    %p50 = scmp.ne.s32.totalorder %s39, %s40
    %p51 = scmp.eq.s32.totalorder %s19, 0
    %p52 = por %p50, %p51
    %p53 = scmp.ne.s32.totalorder %s39, %s40
    %p54 = scmp.eq.s32.totalorder %s20, 1
    %p55 = por %p53, %p54
    %p57 = scmp.ne.s32.totalorder %s40, %s56
    %p58 = scmp.eq.s32.totalorder %s20, 0
    %p59 = por %p57, %p58
    %s60 = ssub.s32 %s21, %s33
    %p61 = scmp.eq.s32.totalorder %s60, 0
    %s63 = sadd.s32 %s62, 1
    %s64 = scalar_select %p61, %s62, %s63
    %p67 = pneg %p61
    %p68 = scmp.eq.s32.totalorder %s14, 1
    %p69 = por %p67, %p68
    %p70 = scmp.ne.s32.totalorder %s62, %s65
    %p71 = scmp.eq.s32.totalorder %s14, 0
    %p72 = por %p70, %p71
    %p73 = scmp.ne.s32.totalorder %s62, %s65
    %p74 = scmp.eq.s32.totalorder %s19, 1
    %p75 = por %p73, %p74
    %p76 = scmp.ne.s32.totalorder %s65, %s66
    %p77 = scmp.eq.s32.totalorder %s19, 0
    %p78 = por %p76, %p77
    %p79 = scmp.ne.s32.totalorder %s65, %s66
    %p80 = scmp.eq.s32.totalorder %s20, 1
    %p81 = por %p79, %p80
    %p83 = scmp.ne.s32.totalorder %s66, %s82
    %p84 = scmp.eq.s32.totalorder %s20, 0
    %p85 = por %p83, %p84
    %s86 = ssub.s32 %s21, %s33
    %p87 = scmp.eq.s32.totalorder %s86, 0
    %s89 = sadd.s32 %s88, 1
    %s90 = scalar_select %p87, %s88, %s89
    %p93 = pneg %p87
    %p94 = scmp.eq.s32.totalorder %s14, 1
    %p95 = por %p93, %p94
    %p96 = scmp.ne.s32.totalorder %s88, %s91
    %p97 = scmp.eq.s32.totalorder %s14, 0
    %p98 = por %p96, %p97
    %p99 = scmp.ne.s32.totalorder %s88, %s91
    %p100 = scmp.eq.s32.totalorder %s19, 1
    %p101 = por %p99, %p100
    %p102 = scmp.ne.s32.totalorder %s91, %s92
    %p103 = scmp.eq.s32.totalorder %s19, 0
    %p104 = por %p102, %p103
    %p105 = scmp.ne.s32.totalorder %s91, %s92
    %p106 = scmp.eq.s32.totalorder %s20, 1
    %p107 = por %p105, %p106
    %p109 = scmp.ne.s32.totalorder %s92, %s108
    %p110 = scmp.eq.s32.totalorder %s20, 0
    %p111 = por %p109, %p110
    %s112 = ssub.s32 %s21, %s33
    %p113 = scmp.eq.s32.totalorder %s112, 0
    %s115 = sadd.s32 %s114, 1
    %s116 = scalar_select %p113, %s114, %s115
    %p119 = pneg %p113
    %p120 = scmp.eq.s32.totalorder %s14, 1
    %p121 = por %p119, %p120
    %p122 = scmp.ne.s32.totalorder %s114, %s117
    %p123 = scmp.eq.s32.totalorder %s14, 0
    %p124 = por %p122, %p123
    %p125 = scmp.ne.s32.totalorder %s114, %s117
    %p126 = scmp.eq.s32.totalorder %s19, 1
    %p127 = por %p125, %p126
    %p128 = scmp.ne.s32.totalorder %s117, %s118
    %p129 = scmp.eq.s32.totalorder %s19, 0
    %p130 = por %p128, %p129
    %p131 = scmp.ne.s32.totalorder %s117, %s118
    %p132 = scmp.eq.s32.totalorder %s20, 1
    %p133 = por %p131, %p132
    %p135 = scmp.ne.s32.totalorder %s118, %s134
    %p136 = scmp.eq.s32.totalorder %s20, 0
    %p137 = por %p135, %p136
    %s138 = ssub.s32 %s21, %s33
    %p139 = scmp.eq.s32.totalorder %s138, 0
    %s141 = sadd.s32 %s140, 1
    %s142 = scalar_select %p139, %s140, %s141
    %p145 = pneg %p139
    %p146 = scmp.eq.s32.totalorder %s14, 1
    %p147 = por %p145, %p146
    %p148 = scmp.ne.s32.totalorder %s140, %s143
    %p149 = scmp.eq.s32.totalorder %s14, 0
    %p150 = por %p148, %p149
    %p151 = scmp.ne.s32.totalorder %s140, %s143
    %p152 = scmp.eq.s32.totalorder %s19, 1
    %p153 = por %p151, %p152
    %p154 = scmp.ne.s32.totalorder %s143, %s144
    %p155 = scmp.eq.s32.totalorder %s19, 0
    %p156 = por %p154, %p155
    %p157 = scmp.ne.s32.totalorder %s143, %s144
    %p158 = scmp.eq.s32.totalorder %s20, 1
    %p159 = por %p157, %p158
    %p161 = scmp.ne.s32.totalorder %s144, %s160
    %p162 = scmp.eq.s32.totalorder %s20, 0
    %p163 = por %p161, %p162
    %s164 = ssub.s32 %s21, %s33
    %p165 = scmp.eq.s32.totalorder %s164, 0
    %s167 = sadd.s32 %s166, 1
    %s168 = scalar_select %p165, %s166, %s167
    %p171 = pneg %p165
    %p172 = scmp.eq.s32.totalorder %s14, 1
    %p173 = por %p171, %p172
    %p174 = scmp.ne.s32.totalorder %s166, %s169
    %p175 = scmp.eq.s32.totalorder %s14, 0
    %p176 = por %p174, %p175
    %p177 = scmp.ne.s32.totalorder %s166, %s169
    %p178 = scmp.eq.s32.totalorder %s19, 1
    %p179 = por %p177, %p178
    %p180 = scmp.ne.s32.totalorder %s169, %s170
    %p181 = scmp.eq.s32.totalorder %s19, 0
    %p182 = por %p180, %p181
    %p183 = scmp.ne.s32.totalorder %s169, %s170
    %p184 = scmp.eq.s32.totalorder %s20, 1
    %p185 = por %p183, %p184
    %p187 = scmp.ne.s32.totalorder %s170, %s186
    %p188 = scmp.eq.s32.totalorder %s20, 0
    %p189 = por %p187, %p188
    %s191 = sadd.s32 %s190, 1
    %p194 = scmp.eq.s32.totalorder %s14, 1
    %p195 = scmp.ne.s32.totalorder %s190, %s192
    %p196 = scmp.eq.s32.totalorder %s14, 0
    %p197 = por %p195, %p196
    %p198 = scmp.ne.s32.totalorder %s190, %s192
    %p199 = scmp.eq.s32.totalorder %s19, 1
    %p200 = por %p198, %p199
    %p201 = scmp.ne.s32.totalorder %s192, %s193
    %p202 = scmp.eq.s32.totalorder %s19, 0
    %p203 = por %p201, %p202
    %p204 = scmp.ne.s32.totalorder %s192, %s193
    %p205 = scmp.eq.s32.totalorder %s20, 1
    %p206 = por %p204, %p205
    %p208 = scmp.ne.s32.totalorder %s193, %s207
    %p209 = scmp.eq.s32.totalorder %s20, 0
    %p210 = por %p208, %p209
    %s212 = sadd.s32 %s211, 1
    %p215 = scmp.eq.s32.totalorder %s14, 1
    %p216 = scmp.ne.s32.totalorder %s211, %s213
    %p217 = scmp.eq.s32.totalorder %s14, 0
    %p218 = por %p216, %p217
    %p219 = scmp.ne.s32.totalorder %s211, %s213
    %p220 = scmp.eq.s32.totalorder %s19, 1
    %p221 = por %p219, %p220
    %p222 = scmp.ne.s32.totalorder %s213, %s214
    %p223 = scmp.eq.s32.totalorder %s19, 0
    %p224 = por %p222, %p223
    %p225 = scmp.ne.s32.totalorder %s213, %s214
    %p226 = scmp.eq.s32.totalorder %s20, 1
    %p227 = por %p225, %p226
    %p229 = scmp.ne.s32.totalorder %s214, %s228
    %p230 = scmp.eq.s32.totalorder %s20, 0
    %p231 = por %p229, %p230
    %s232 = ssub.s32 %s21, %s33
    %s233 = ssub.s32 %s22, %s29
    %s234 = sor.u32 %s232, %s233
    %p235 = scmp.eq.s32.totalorder %s234, 0
    %s237 = sadd.s32 %s236, 1
    %s238 = scalar_select %p235, %s236, %s237
    %p241 = pneg %p235
    %p242 = scmp.eq.s32.totalorder %s14, 1
    %p243 = por %p241, %p242
    %p244 = scmp.ne.s32.totalorder %s236, %s239
    %p245 = scmp.eq.s32.totalorder %s14, 0
    %p246 = por %p244, %p245
    %p247 = scmp.ne.s32.totalorder %s236, %s239
    %p248 = scmp.eq.s32.totalorder %s19, 1
    %p249 = por %p247, %p248
    %p250 = scmp.ne.s32.totalorder %s239, %s240
    %p251 = scmp.eq.s32.totalorder %s19, 0
    %p252 = por %p250, %p251
    %p253 = scmp.ne.s32.totalorder %s239, %s240
    %p254 = scmp.eq.s32.totalorder %s20, 1
    %p255 = por %p253, %p254
    %p257 = scmp.ne.s32.totalorder %s240, %s256
    %p258 = scmp.eq.s32.totalorder %s20, 0
    %p259 = por %p257, %p258
    %p260 = scmp.le.s32.totalorder 1, %s14
    %p261 = scmp.lt.s32.totalorder %s14, 3
    %p262 = pnand %p260, %p261
    %p263 = pneg %p262
    // Predicated region
    $region9: #{conv_tokenizer_forward.2} parent=5 // pred_check
      _
    $region10: #{conv_tokenizer_forward.2} parent=5 // pred_check_branch
      %265 = sbr.rel (%p262) target = $region12
    $region11: #{conv_tokenizer_forward.2} parent=5 // pred_region
      %s266 = ssub.s32 %s14, 1
      // Predicated region
      $region13: #{conv_tokenizer_forward.2} parent=11 // pred_check
        %p267 = pneg %p203
      $region14: #{conv_tokenizer_forward.2} parent=11 // pred_check_branch
        %269 = sbr.rel (%p267) target = $region16
      $region15: #{conv_tokenizer_forward.2} parent=11 // pred_region
        _
      $region16: #{conv_tokenizer_forward.2} parent=11 // pred_fallthru
        _
      // Predicated region
      $region17: #{conv_tokenizer_forward.2} parent=11 // pred_check
        %p270 = pneg %p224
      $region18: #{conv_tokenizer_forward.2} parent=11 // pred_check_branch
        %272 = sbr.rel (%p270) target = $region20
      $region19: #{conv_tokenizer_forward.2} parent=11 // pred_region
        _
      $region20: #{conv_tokenizer_forward.2} parent=11 // pred_fallthru
        _
    $region12: #{conv_tokenizer_forward.2} parent=5 // pred_fallthru
      _
    %p273 = scmp.lt.s32.totalorder %s14, 2
    // Predicated region
    $region21: #{conv_tokenizer_forward.2} parent=5 // pred_check
      %p274 = pneg %p273
    $region22: #{conv_tokenizer_forward.2} parent=5 // pred_check_branch
      %276 = sbr.rel (%p274) target = $region24
    $region23: #{conv_tokenizer_forward.2} parent=5 // pred_region
      // Predicated region
      $region25: #{conv_tokenizer_forward.2} parent=23 // pred_check
        %p277 = pneg %p46
      $region26: #{conv_tokenizer_forward.2} parent=23 // pred_check_branch
        %279 = sbr.rel (%p277) target = $region28
      $region27: #{conv_tokenizer_forward.2} parent=23 // pred_region
        %p280 = scmp.lt.s32.totalorder %s21, 1
        %s281 = scalar_select %p280, %s21, 1
        %s282 = smul.addr %s281, 9
        %s283 = smul.addr %s282, 4
        %s284 = scalar_lea.vmem %s0, %s283
      $region28: #{conv_tokenizer_forward.2} parent=23 // pred_fallthru
        _
      // Predicated region
      $region29: #{conv_tokenizer_forward.2} parent=23 // pred_check
        %p285 = pneg %p72
      $region30: #{conv_tokenizer_forward.2} parent=23 // pred_check_branch
        %287 = sbr.rel (%p285) target = $region32
      $region31: #{conv_tokenizer_forward.2} parent=23 // pred_region
        %p288 = scmp.lt.s32.totalorder %s21, 1
        %s289 = scalar_select %p288, %s21, 1
        %s290 = smul.addr %s289, 9
        %s291 = smul.addr %s290, 4
        %s292 = scalar_lea.vmem %s1, %s291
      $region32: #{conv_tokenizer_forward.2} parent=23 // pred_fallthru
        _
      // Predicated region
      $region33: #{conv_tokenizer_forward.2} parent=23 // pred_check
        %p293 = pneg %p98
      $region34: #{conv_tokenizer_forward.2} parent=23 // pred_check_branch
        %295 = sbr.rel (%p293) target = $region36
      $region35: #{conv_tokenizer_forward.2} parent=23 // pred_region
        %p296 = scmp.lt.s32.totalorder %s21, 1
        %s297 = scalar_select %p296, %s21, 1
        %s298 = smul.addr %s297, 9
        %s299 = smul.addr %s298, 4
        %s300 = scalar_lea.vmem %s2, %s299
      $region36: #{conv_tokenizer_forward.2} parent=23 // pred_fallthru
        _
      // Predicated region
      $region37: #{conv_tokenizer_forward.2} parent=23 // pred_check
        %p301 = pneg %p124
      $region38: #{conv_tokenizer_forward.2} parent=23 // pred_check_branch
        %303 = sbr.rel (%p301) target = $region40
      $region39: #{conv_tokenizer_forward.2} parent=23 // pred_region
        %p304 = scmp.lt.s32.totalorder %s21, 1
        %s305 = scalar_select %p304, %s21, 1
        %s306 = smul.addr %s305, 8
        %s307 = smul.addr %s306, 4
        %s308 = scalar_lea.vmem %s3, %s307
      $region40: #{conv_tokenizer_forward.2} parent=23 // pred_fallthru
        _
      // Predicated region
      $region41: #{conv_tokenizer_forward.2} parent=23 // pred_check
        %p309 = pneg %p150
      $region42: #{conv_tokenizer_forward.2} parent=23 // pred_check_branch
        %311 = sbr.rel (%p309) target = $region44
      $region43: #{conv_tokenizer_forward.2} parent=23 // pred_region
        %p312 = scmp.lt.s32.totalorder %s21, 1
        %s313 = scalar_select %p312, %s21, 1
        %s314 = smul.addr %s313, 8
        %s315 = smul.addr %s314, 4
        %s316 = scalar_lea.vmem %s4, %s315
      $region44: #{conv_tokenizer_forward.2} parent=23 // pred_fallthru
        _
      // Predicated region
      $region45: #{conv_tokenizer_forward.2} parent=23 // pred_check
        %p317 = pneg %p176
      $region46: #{conv_tokenizer_forward.2} parent=23 // pred_check_branch
        %319 = sbr.rel (%p317) target = $region48
      $region47: #{conv_tokenizer_forward.2} parent=23 // pred_region
        %p320 = scmp.lt.s32.totalorder %s21, 1
        %s321 = scalar_select %p320, %s21, 1
        %s322 = smul.addr %s321, 8
        %s323 = smul.addr %s322, 4
        %s324 = scalar_lea.vmem %s5, %s323
      $region48: #{conv_tokenizer_forward.2} parent=23 // pred_fallthru
        _
    $region24: #{conv_tokenizer_forward.2} parent=5 // pred_fallthru
      _
    %p325 = scmp.le.s32.totalorder 1, %s14
    %p326 = scmp.lt.s32.totalorder %s14, 3
    %p327 = pnand %p325, %p326
    %p328 = pneg %p327
    // Predicated region
    $region49: #{conv_tokenizer_forward.2} parent=5 // pred_check
      _
    $region50: #{conv_tokenizer_forward.2} parent=5 // pred_check_branch
      %330 = sbr.rel (%p327) target = $region52
    $region51: #{conv_tokenizer_forward.2} parent=5 // pred_region
      %s331 = ssub.s32 %s14, 1
      %p332 = scmp.lt.s32.totalorder %s23, 1
      %s333 = scalar_select %p332, %s23, 1
      %s334 = smul.addr %s333, 9
      %s335 = smul.addr %s334, 4
      %s336 = scalar_lea.vmem %s0, %s335
      %p337 = pneg %p52
      %p338 = pneg %p49
      %p339 = scmp.lt.s32.totalorder %s23, 1
      %s340 = scalar_select %p339, %s23, 1
      %s341 = smul.addr %s340, 9
      %s342 = smul.addr %s341, 4
      %s343 = scalar_lea.vmem %s1, %s342
      %p344 = pneg %p78
      %p345 = pneg %p75
      %p346 = scmp.lt.s32.totalorder %s23, 1
      %s347 = scalar_select %p346, %s23, 1
      %s348 = smul.addr %s347, 9
      %s349 = smul.addr %s348, 4
      %s350 = scalar_lea.vmem %s2, %s349
      %p351 = pneg %p104
      %p352 = pneg %p101
      %p353 = scmp.lt.s32.totalorder %s23, 1
      %s354 = scalar_select %p353, %s23, 1
      %s355 = smul.addr %s354, 8
      %s356 = smul.addr %s355, 4
      %s357 = scalar_lea.vmem %s3, %s356
      %p358 = pneg %p130
      %p359 = pneg %p127
      %p360 = scmp.lt.s32.totalorder %s23, 1
      %s361 = scalar_select %p360, %s23, 1
      %s362 = smul.addr %s361, 8
      %s363 = smul.addr %s362, 4
      %s364 = scalar_lea.vmem %s4, %s363
      %p365 = pneg %p156
      %p366 = pneg %p153
      %p367 = scmp.lt.s32.totalorder %s23, 1
      %s368 = scalar_select %p367, %s23, 1
      %s369 = smul.addr %s368, 8
      %s370 = smul.addr %s369, 4
      %s371 = scalar_lea.vmem %s5, %s370
      %p372 = pneg %p182
      %p373 = pneg %p179
      %p374 = pneg %p203
      %p375 = pneg %p200
      %p376 = pneg %p224
      %p377 = pneg %p221
      %p378 = pneg %p252
      %p379 = pneg %p249
      %s380 = smul.u32 8, %s24
      %p381 = scmp.lt.s32.totalorder %s23, 1
      %s382 = scalar_select %p381, %s23, 1
      %p383 = scmp.lt.s32.totalorder %s380, 7
      %s384 = scalar_select %p383, %s380, 7
      %s385 = smul.addr %s382, 8
      %s386 = sadd.s32 %s384, %s385
      %s387 = smul.addr %s386, 8
      %s388 = scalar_lea.vmem %s8, %s387
      %p389 = scmp.lt.s32.totalorder %s23, 1
      %s390 = scalar_select %p389, %s23, 1
      %s391 = smul.addr %s390, 9
      %s392 = smul.addr %s391, 4
      %s393 = scalar_lea.vmem %s0, %s392
      %p394 = scmp.lt.s32.totalorder %s23, 1
      %s395 = scalar_select %p394, %s23, 1
      %s396 = smul.addr %s395, 9
      %s397 = smul.addr %s396, 4
      %s398 = scalar_lea.vmem %s1, %s397
      %p399 = scmp.lt.s32.totalorder %s23, 1
      %s400 = scalar_select %p399, %s23, 1
      %s401 = smul.addr %s400, 9
      %s402 = smul.addr %s401, 4
      %s403 = scalar_lea.vmem %s2, %s402
      %p404 = scmp.lt.s32.totalorder %s23, 1
      %s405 = scalar_select %p404, %s23, 1
      %s406 = smul.addr %s405, 8
      %s407 = smul.addr %s406, 4
      %s408 = scalar_lea.vmem %s3, %s407
      %p409 = scmp.lt.s32.totalorder %s23, 1
      %s410 = scalar_select %p409, %s23, 1
      %s411 = smul.addr %s410, 8
      %s412 = smul.addr %s411, 4
      %s413 = scalar_lea.vmem %s4, %s412
      %p414 = scmp.lt.s32.totalorder %s23, 1
      %s415 = scalar_select %p414, %s23, 1
      %s416 = smul.addr %s415, 8
      %s417 = smul.addr %s416, 4
      %s418 = scalar_lea.vmem %s5, %s417
      %s419 = smul.u32 8, %s24
      %p420 = scmp.lt.s32.totalorder %s23, 1
      %s421 = scalar_select %p420, %s23, 1
      %p422 = scmp.lt.s32.totalorder %s419, 7
      %s423 = scalar_select %p422, %s419, 7
      %s424 = smul.addr %s421, 8
      %s425 = sadd.s32 %s423, %s424
      %s426 = smul.addr %s425, 8
      %s427 = scalar_lea.vmem %s8, %s426
      %s428 = smul.u32 8, %s24
      %v430 = vld [vmem:[%s393] sm:$0xf]
      %v431 = vld [vmem:[%s393 + $0x4] sm:$0xf]
      %v432 = vld [vmem:[%s393 + $0x8] sm:$0xf]
      %v433 = vld [vmem:[%s393 + $0xc] sm:$0xf]
      %v434 = vld [vmem:[%s393 + $0x10] sm:$0xf]
      %v435 = vld [vmem:[%s393 + $0x14] sm:$0xf]
      %v436 = vld [vmem:[%s393 + $0x18] sm:$0xf]
      %v437 = vld [vmem:[%s393 + $0x1c] sm:$0xf]
      %v438 = vld [vmem:[%s6] sm:$0x3]
      %v439 = vld [vmem:[%s398] sm:$0xf]
      %v440 = vld [vmem:[%s398 + $0x4] sm:$0xf]
      %v441 = vld [vmem:[%s398 + $0x8] sm:$0xf]
      %v442 = vld [vmem:[%s398 + $0xc] sm:$0xf]
      %v443 = vld [vmem:[%s398 + $0x10] sm:$0xf]
      %v444 = vld [vmem:[%s398 + $0x14] sm:$0xf]
      %v445 = vld [vmem:[%s398 + $0x18] sm:$0xf]
      %v446 = vld [vmem:[%s398 + $0x1c] sm:$0xf]
      %s447 = scalar_lea.vmem %s6, 2
      %v448 = vld [vmem:[%s447] sm:$0x3]
      %v457 = vunpack.c.l.b16 %v439
      %v458 = vunpack.c.l.b16 %v440
      %v459 = vunpack.c.l.b16 %v441
      %v460 = vunpack.c.l.b16 %v442
      %v461 = vunpack.c.l.b16 %v443
      %v462 = vunpack.c.l.b16 %v444
      %v463 = vunpack.c.l.b16 %v445
      %v464 = vunpack.c.l.b16 %v446
      %v465 = vpack.c.b16 %v458, %v457
      %v466 = vpack.c.b16 %v460, %v459
      %v467 = vpack.c.b16 %v462, %v461
      %v468 = vpack.c.b16 %v464, %v463
      %vm469 = vcmask 31744
      %v471 = vsel %vm469, %v465, 0
      %v474 = vsel %vm469, %v466, 0
      %v477 = vsel %vm469, %v467, 0
      %v480 = vsel %vm469, %v468, 0
      %vm482 = vcmask 1041408
      %v484 = vsel %vm482, %v448, 0
      %486 = vmatprep.subr.bf16.mxu0 0
      %487 = vmatpush1.bf16.msra.mxu0 0
      %488 = vmatprep.subr.bf16.mxu0 0
      %489 = vmatpush1.bf16.msra.mxu0 0
      %490 = vmatprep.subr.bf16.mxu0 0
      %491 = vmatpush1.bf16.msra.mxu0 0
      %492 = vmatprep.subr.bf16.mxu0 0
      %493 = vmatpush1.bf16.msra.mxu0 0
      %494 = vmatprep.subr.bf16.mxu0 0
      %495 = vmatpush1.bf16.msra.mxu0 0
      %496 = vmatprep.subr.bf16.mxu0 0
      %497 = vmatpush1.bf16.msra.mxu0 0
      %498 = vmatprep.subr.bf16.mxu0 0
      %499 = vmatpush1.bf16.msra.mxu0 0
      %500 = vmatprep.subr.bf16.mxu0 0
      %501 = vmatpush1.bf16.msra.mxu0 %v484
      %502 = vmatprep.subr.bf16.mxu0 0
      %503 = vmatpush2.bf16.msra.mxu0 0
      %504 = vmatprep.subr.bf16.mxu0 0
      %505 = vmatpush2.bf16.msra.mxu0 0
      %506 = vmatprep.subr.bf16.mxu0 0
      %507 = vmatpush2.bf16.msra.mxu0 0
      %508 = vmatprep.subr.bf16.mxu0 0
      %509 = vmatpush2.bf16.msra.mxu0 0
      %510 = vmatprep.subr.bf16.mxu0 0
      %511 = vmatpush2.bf16.msra.mxu0 0
      %512 = vmatprep.subr.bf16.mxu0 0
      %513 = vmatpush2.bf16.msra.mxu0 0
      %514 = vmatprep.subr.bf16.mxu0 0
      %515 = vmatpush2.bf16.msra.mxu0 0
      %516 = vmatprep.subr.bf16.mxu0 0
      %517 = vmatpush2.bf16.msra.mxu0 0
      %518 = vmatprep.mubr.bf16.mxu0 0
      %519 = vmatmul.mubr.bf16.gmra.mxu0 %v471
      %v520 = vpop.f32.mrf.mxu0
      %v521 = vadd.f32 0.0, %v520
      %v522 = vpop.f32.mrf.mxu0
      %v523 = vpop.f32.mrf.mxu0
      %v524 = vadd.f32 0.0, %v523
      %v525 = vpop.f32.mrf.mxu0
      %526 = vmatprep.mubr.bf16.mxu0 0
      %527 = vmatmul.mubr.bf16.gmra.mxu0 %v474
      %v528 = vpop.f32.mrf.mxu0
      %v529 = vadd.f32 0.0, %v528
      %v530 = vpop.f32.mrf.mxu0
      %v531 = vpop.f32.mrf.mxu0
      %v532 = vadd.f32 0.0, %v531
      %v533 = vpop.f32.mrf.mxu0
      %534 = vmatprep.mubr.bf16.mxu0 0
      %535 = vmatmul.mubr.bf16.gmra.mxu0 %v477
      %v536 = vpop.f32.mrf.mxu0
      %v537 = vadd.f32 0.0, %v536
      %v538 = vpop.f32.mrf.mxu0
      %v539 = vpop.f32.mrf.mxu0
      %v540 = vadd.f32 0.0, %v539
      %v541 = vpop.f32.mrf.mxu0
      %542 = vmatprep.mubr.bf16.mxu0 0
      %543 = vmatmul.mubr.bf16.gmra.mxu0 %v480
      %v544 = vpop.f32.mrf.mxu0
      %v545 = vadd.f32 0.0, %v544
      %v546 = vpop.f32.mrf.mxu0
      %v547 = vpop.f32.mrf.mxu0
      %v548 = vadd.f32 0.0, %v547
      %v549 = vpop.f32.mrf.mxu0
      %550 = vdwg.mxu0
      %v559 = vunpack.c.l.b16 %v430
      %v560 = vunpack.c.l.b16 %v431
      %v561 = vunpack.c.l.b16 %v432
      %v562 = vunpack.c.l.b16 %v433
      %v563 = vunpack.c.l.b16 %v434
      %v564 = vunpack.c.l.b16 %v435
      %v565 = vunpack.c.l.b16 %v436
      %v566 = vunpack.c.l.b16 %v437
      %v567 = vpack.c.b16 %v560, %v559
      %v568 = vpack.c.b16 %v562, %v561
      %v569 = vpack.c.b16 %v564, %v563
      %v570 = vpack.c.b16 %v566, %v565
      %v572 = vsel %vm469, %v567, 0
      %v575 = vsel %vm469, %v568, 0
      %v578 = vsel %vm469, %v569, 0
      %v581 = vsel %vm469, %v570, 0
      %v584 = vsel %vm482, %v438, 0
      %586 = vmatprep.subr.bf16.mxu0 0
      %587 = vmatpush1.bf16.msra.mxu0 0
      %588 = vmatprep.subr.bf16.mxu0 0
      %589 = vmatpush1.bf16.msra.mxu0 0
      %590 = vmatprep.subr.bf16.mxu0 0
      %591 = vmatpush1.bf16.msra.mxu0 0
      %592 = vmatprep.subr.bf16.mxu0 0
      %593 = vmatpush1.bf16.msra.mxu0 0
      %594 = vmatprep.subr.bf16.mxu0 0
      %595 = vmatpush1.bf16.msra.mxu0 0
      %596 = vmatprep.subr.bf16.mxu0 0
      %597 = vmatpush1.bf16.msra.mxu0 0
      %598 = vmatprep.subr.bf16.mxu0 0
      %599 = vmatpush1.bf16.msra.mxu0 0
      %600 = vmatprep.subr.bf16.mxu0 0
      %601 = vmatpush1.bf16.msra.mxu0 %v584
      %602 = vmatprep.subr.bf16.mxu0 0
      %603 = vmatpush2.bf16.msra.mxu0 0
      %604 = vmatprep.subr.bf16.mxu0 0
      %605 = vmatpush2.bf16.msra.mxu0 0
      %606 = vmatprep.subr.bf16.mxu0 0
      %607 = vmatpush2.bf16.msra.mxu0 0
      %608 = vmatprep.subr.bf16.mxu0 0
      %609 = vmatpush2.bf16.msra.mxu0 0
      %610 = vmatprep.subr.bf16.mxu0 0
      %611 = vmatpush2.bf16.msra.mxu0 0
      %612 = vmatprep.subr.bf16.mxu0 0
      %613 = vmatpush2.bf16.msra.mxu0 0
      %614 = vmatprep.subr.bf16.mxu0 0
      %615 = vmatpush2.bf16.msra.mxu0 0
      %616 = vmatprep.subr.bf16.mxu0 0
      %617 = vmatpush2.bf16.msra.mxu0 0
      %618 = vmatprep.mubr.bf16.mxu0 0
      %619 = vmatmul.mubr.bf16.gmra.mxu0 %v572
      %v620 = vpop.f32.mrf.mxu0
      %v621 = vadd.f32 %v521, %v620
      %v622 = vpop.f32.mrf.mxu0
      %v623 = vpop.f32.mrf.mxu0
      %v624 = vadd.f32 %v524, %v623
      %v625 = vpop.f32.mrf.mxu0
      %626 = vmatprep.mubr.bf16.mxu0 0
      %627 = vmatmul.mubr.bf16.gmra.mxu0 %v575
      %v628 = vpop.f32.mrf.mxu0
      %v629 = vadd.f32 %v529, %v628
      %v630 = vpop.f32.mrf.mxu0
      %v631 = vpop.f32.mrf.mxu0
      %v632 = vadd.f32 %v532, %v631
      %v633 = vpop.f32.mrf.mxu0
      %634 = vmatprep.mubr.bf16.mxu0 0
      %635 = vmatmul.mubr.bf16.gmra.mxu0 %v578
      %v636 = vpop.f32.mrf.mxu0
      %v637 = vadd.f32 %v537, %v636
      %v638 = vpop.f32.mrf.mxu0
      %v639 = vpop.f32.mrf.mxu0
      %v640 = vadd.f32 %v540, %v639
      %v641 = vpop.f32.mrf.mxu0
      %642 = vmatprep.mubr.bf16.mxu0 0
      %643 = vmatmul.mubr.bf16.gmra.mxu0 %v581
      %v644 = vpop.f32.mrf.mxu0
      %v645 = vadd.f32 %v545, %v644
      %v646 = vpop.f32.mrf.mxu0
      %v647 = vpop.f32.mrf.mxu0
      %v648 = vadd.f32 %v548, %v647
      %v649 = vpop.f32.mrf.mxu0
      %650 = vdwg.mxu0
      %v651 = vld [vmem:[%s403] sm:$0xf]
      %v652 = vld [vmem:[%s403 + $0x4] sm:$0xf]
      %v653 = vld [vmem:[%s403 + $0x8] sm:$0xf]
      %v654 = vld [vmem:[%s403 + $0xc] sm:$0xf]
      %v655 = vld [vmem:[%s403 + $0x10] sm:$0xf]
      %v656 = vld [vmem:[%s403 + $0x14] sm:$0xf]
      %v657 = vld [vmem:[%s403 + $0x18] sm:$0xf]
      %v658 = vld [vmem:[%s403 + $0x1c] sm:$0xf]
      %s659 = scalar_lea.vmem %s6, 4
      %v660 = vld [vmem:[%s659] sm:$0x3]
      %v669 = vunpack.c.l.b16 %v651
      %v670 = vunpack.c.l.b16 %v652
      %v671 = vunpack.c.l.b16 %v653
      %v672 = vunpack.c.l.b16 %v654
      %v673 = vunpack.c.l.b16 %v655
      %v674 = vunpack.c.l.b16 %v656
      %v675 = vunpack.c.l.b16 %v657
      %v676 = vunpack.c.l.b16 %v658
      %v677 = vpack.c.b16 %v670, %v669
      %v678 = vpack.c.b16 %v672, %v671
      %v679 = vpack.c.b16 %v674, %v673
      %v680 = vpack.c.b16 %v676, %v675
      %v682 = vsel %vm469, %v677, 0
      %v685 = vsel %vm469, %v678, 0
      %v688 = vsel %vm469, %v679, 0
      %v691 = vsel %vm469, %v680, 0
      %v694 = vsel %vm482, %v660, 0
      %696 = vmatprep.subr.bf16.mxu0 0
      %697 = vmatpush1.bf16.msra.mxu0 0
      %698 = vmatprep.subr.bf16.mxu0 0
      %699 = vmatpush1.bf16.msra.mxu0 0
      %700 = vmatprep.subr.bf16.mxu0 0
      %701 = vmatpush1.bf16.msra.mxu0 0
      %702 = vmatprep.subr.bf16.mxu0 0
      %703 = vmatpush1.bf16.msra.mxu0 0
      %704 = vmatprep.subr.bf16.mxu0 0
      %705 = vmatpush1.bf16.msra.mxu0 0
      %706 = vmatprep.subr.bf16.mxu0 0
      %707 = vmatpush1.bf16.msra.mxu0 0
      %708 = vmatprep.subr.bf16.mxu0 0
      %709 = vmatpush1.bf16.msra.mxu0 0
      %710 = vmatprep.subr.bf16.mxu0 0
      %711 = vmatpush1.bf16.msra.mxu0 %v694
      %712 = vmatprep.subr.bf16.mxu0 0
      %713 = vmatpush2.bf16.msra.mxu0 0
      %714 = vmatprep.subr.bf16.mxu0 0
      %715 = vmatpush2.bf16.msra.mxu0 0
      %716 = vmatprep.subr.bf16.mxu0 0
      %717 = vmatpush2.bf16.msra.mxu0 0
      %718 = vmatprep.subr.bf16.mxu0 0
      %719 = vmatpush2.bf16.msra.mxu0 0
      %720 = vmatprep.subr.bf16.mxu0 0
      %721 = vmatpush2.bf16.msra.mxu0 0
      %722 = vmatprep.subr.bf16.mxu0 0
      %723 = vmatpush2.bf16.msra.mxu0 0
      %724 = vmatprep.subr.bf16.mxu0 0
      %725 = vmatpush2.bf16.msra.mxu0 0
      %726 = vmatprep.subr.bf16.mxu0 0
      %727 = vmatpush2.bf16.msra.mxu0 0
      %728 = vmatprep.mubr.bf16.mxu0 0
      %729 = vmatmul.mubr.bf16.gmra.mxu0 %v682
      %v730 = vpop.f32.mrf.mxu0
      %v731 = vadd.f32 0.0, %v730
      %v732 = vpop.f32.mrf.mxu0
      %v733 = vpop.f32.mrf.mxu0
      %v734 = vadd.f32 0.0, %v733
      %v735 = vpop.f32.mrf.mxu0
      %736 = vmatprep.mubr.bf16.mxu0 0
      %737 = vmatmul.mubr.bf16.gmra.mxu0 %v685
      %v738 = vpop.f32.mrf.mxu0
      %v739 = vadd.f32 0.0, %v738
      %v740 = vpop.f32.mrf.mxu0
      %v741 = vpop.f32.mrf.mxu0
      %v742 = vadd.f32 0.0, %v741
      %v743 = vpop.f32.mrf.mxu0
      %744 = vmatprep.mubr.bf16.mxu0 0
      %745 = vmatmul.mubr.bf16.gmra.mxu0 %v688
      %v746 = vpop.f32.mrf.mxu0
      %v747 = vadd.f32 0.0, %v746
      %v748 = vpop.f32.mrf.mxu0
      %v749 = vpop.f32.mrf.mxu0
      %v750 = vadd.f32 0.0, %v749
      %v751 = vpop.f32.mrf.mxu0
      %752 = vmatprep.mubr.bf16.mxu0 0
      %753 = vmatmul.mubr.bf16.gmra.mxu0 %v691
      %v754 = vpop.f32.mrf.mxu0
      %v755 = vadd.f32 0.0, %v754
      %v756 = vpop.f32.mrf.mxu0
      %v757 = vpop.f32.mrf.mxu0
      %v758 = vadd.f32 0.0, %v757
      %v759 = vpop.f32.mrf.mxu0
      %760 = vdwg.mxu0
      %v761 = vadd.f32 %v621, %v731
      %v762 = vadd.f32 %v624, %v734
      %v763 = vadd.f32 %v629, %v739
      %v764 = vadd.f32 %v632, %v742
      %v765 = vadd.f32 %v637, %v747
      %v766 = vadd.f32 %v640, %v750
      %v767 = vadd.f32 %v645, %v755
      %v768 = vadd.f32 %v648, %v758
      %v769 = vld [vmem:[%s408] sm:$0xf]
      %v770 = vld [vmem:[%s408 + $0x4] sm:$0xf]
      %v771 = vld [vmem:[%s408 + $0x8] sm:$0xf]
      %v772 = vld [vmem:[%s408 + $0xc] sm:$0xf]
      %v773 = vld [vmem:[%s408 + $0x10] sm:$0xf]
      %v774 = vld [vmem:[%s408 + $0x14] sm:$0xf]
      %v775 = vld [vmem:[%s408 + $0x18] sm:$0xf]
      %v776 = vld [vmem:[%s408 + $0x1c] sm:$0xf]
      %s777 = scalar_lea.vmem %s6, 6
      %v778 = vld [vmem:[%s777] sm:$0x3]
      %v787 = vunpack.c.l.b16 %v769
      %v788 = vunpack.c.l.b16 %v770
      %v789 = vunpack.c.l.b16 %v771
      %v790 = vunpack.c.l.b16 %v772
      %v791 = vunpack.c.l.b16 %v773
      %v792 = vunpack.c.l.b16 %v774
      %v793 = vunpack.c.l.b16 %v775
      %v794 = vunpack.c.l.b16 %v776
      %v795 = vpack.c.b16 %v788, %v787
      %v796 = vpack.c.b16 %v790, %v789
      %v797 = vpack.c.b16 %v792, %v791
      %v798 = vpack.c.b16 %v794, %v793
      %v800 = vsel %vm469, %v795, 0
      %v803 = vsel %vm469, %v796, 0
      %v806 = vsel %vm469, %v797, 0
      %v809 = vsel %vm469, %v798, 0
      %v812 = vsel %vm482, %v778, 0
      %814 = vmatprep.subr.bf16.mxu0 0
      %815 = vmatpush1.bf16.msra.mxu0 0
      %816 = vmatprep.subr.bf16.mxu0 0
      %817 = vmatpush1.bf16.msra.mxu0 0
      %818 = vmatprep.subr.bf16.mxu0 0
      %819 = vmatpush1.bf16.msra.mxu0 0
      %820 = vmatprep.subr.bf16.mxu0 0
      %821 = vmatpush1.bf16.msra.mxu0 0
      %822 = vmatprep.subr.bf16.mxu0 0
      %823 = vmatpush1.bf16.msra.mxu0 0
      %824 = vmatprep.subr.bf16.mxu0 0
      %825 = vmatpush1.bf16.msra.mxu0 0
      %826 = vmatprep.subr.bf16.mxu0 0
      %827 = vmatpush1.bf16.msra.mxu0 0
      %828 = vmatprep.subr.bf16.mxu0 0
      %829 = vmatpush1.bf16.msra.mxu0 %v812
      %830 = vmatprep.subr.bf16.mxu0 0
      %831 = vmatpush2.bf16.msra.mxu0 0
      %832 = vmatprep.subr.bf16.mxu0 0
      %833 = vmatpush2.bf16.msra.mxu0 0
      %834 = vmatprep.subr.bf16.mxu0 0
      %835 = vmatpush2.bf16.msra.mxu0 0
      %836 = vmatprep.subr.bf16.mxu0 0
      %837 = vmatpush2.bf16.msra.mxu0 0
      %838 = vmatprep.subr.bf16.mxu0 0
      %839 = vmatpush2.bf16.msra.mxu0 0
      %840 = vmatprep.subr.bf16.mxu0 0
      %841 = vmatpush2.bf16.msra.mxu0 0
      %842 = vmatprep.subr.bf16.mxu0 0
      %843 = vmatpush2.bf16.msra.mxu0 0
      %844 = vmatprep.subr.bf16.mxu0 0
      %845 = vmatpush2.bf16.msra.mxu0 0
      %846 = vmatprep.mubr.bf16.mxu0 0
      %847 = vmatmul.mubr.bf16.gmra.mxu0 %v800
      %v848 = vpop.f32.mrf.mxu0
      %v849 = vadd.f32 0.0, %v848
      %v850 = vpop.f32.mrf.mxu0
      %v851 = vpop.f32.mrf.mxu0
      %v852 = vadd.f32 0.0, %v851
      %v853 = vpop.f32.mrf.mxu0
      %854 = vmatprep.mubr.bf16.mxu0 0
      %855 = vmatmul.mubr.bf16.gmra.mxu0 %v803
      %v856 = vpop.f32.mrf.mxu0
      %v857 = vadd.f32 0.0, %v856
      %v858 = vpop.f32.mrf.mxu0
      %v859 = vpop.f32.mrf.mxu0
      %v860 = vadd.f32 0.0, %v859
      %v861 = vpop.f32.mrf.mxu0
      %862 = vmatprep.mubr.bf16.mxu0 0
      %863 = vmatmul.mubr.bf16.gmra.mxu0 %v806
      %v864 = vpop.f32.mrf.mxu0
      %v865 = vadd.f32 0.0, %v864
      %v866 = vpop.f32.mrf.mxu0
      %v867 = vpop.f32.mrf.mxu0
      %v868 = vadd.f32 0.0, %v867
      %v869 = vpop.f32.mrf.mxu0
      %870 = vmatprep.mubr.bf16.mxu0 0
      %871 = vmatmul.mubr.bf16.gmra.mxu0 %v809
      %v872 = vpop.f32.mrf.mxu0
      %v873 = vadd.f32 0.0, %v872
      %v874 = vpop.f32.mrf.mxu0
      %v875 = vpop.f32.mrf.mxu0
      %v876 = vadd.f32 0.0, %v875
      %v877 = vpop.f32.mrf.mxu0
      %878 = vdwg.mxu0
      %v879 = vadd.f32 %v761, %v849
      %v880 = vadd.f32 %v762, %v852
      %v881 = vadd.f32 %v763, %v857
      %v882 = vadd.f32 %v764, %v860
      %v883 = vadd.f32 %v765, %v865
      %v884 = vadd.f32 %v766, %v868
      %v885 = vadd.f32 %v767, %v873
      %v886 = vadd.f32 %v768, %v876
      %v887 = vld [vmem:[%s413] sm:$0xf]
      %v888 = vld [vmem:[%s413 + $0x4] sm:$0xf]
      %v889 = vld [vmem:[%s413 + $0x8] sm:$0xf]
      %v890 = vld [vmem:[%s413 + $0xc] sm:$0xf]
      %v891 = vld [vmem:[%s413 + $0x10] sm:$0xf]
      %v892 = vld [vmem:[%s413 + $0x14] sm:$0xf]
      %v893 = vld [vmem:[%s413 + $0x18] sm:$0xf]
      %v894 = vld [vmem:[%s413 + $0x1c] sm:$0xf]
      %s895 = scalar_lea.vmem %s6, 8
      %v896 = vld [vmem:[%s895] sm:$0x3]
      %v905 = vunpack.c.l.b16 %v887
      %v906 = vunpack.c.l.b16 %v888
      %v907 = vunpack.c.l.b16 %v889
      %v908 = vunpack.c.l.b16 %v890
      %v909 = vunpack.c.l.b16 %v891
      %v910 = vunpack.c.l.b16 %v892
      %v911 = vunpack.c.l.b16 %v893
      %v912 = vunpack.c.l.b16 %v894
      %v913 = vpack.c.b16 %v906, %v905
      %v914 = vpack.c.b16 %v908, %v907
      %v915 = vpack.c.b16 %v910, %v909
      %v916 = vpack.c.b16 %v912, %v911
      %v918 = vsel %vm469, %v913, 0
      %v921 = vsel %vm469, %v914, 0
      %v924 = vsel %vm469, %v915, 0
      %v927 = vsel %vm469, %v916, 0
      %v930 = vsel %vm482, %v896, 0
      %932 = vmatprep.subr.bf16.mxu0 0
      %933 = vmatpush1.bf16.msra.mxu0 0
      %934 = vmatprep.subr.bf16.mxu0 0
      %935 = vmatpush1.bf16.msra.mxu0 0
      %936 = vmatprep.subr.bf16.mxu0 0
      %937 = vmatpush1.bf16.msra.mxu0 0
      %938 = vmatprep.subr.bf16.mxu0 0
      %939 = vmatpush1.bf16.msra.mxu0 0
      %940 = vmatprep.subr.bf16.mxu0 0
      %941 = vmatpush1.bf16.msra.mxu0 0
      %942 = vmatprep.subr.bf16.mxu0 0
      %943 = vmatpush1.bf16.msra.mxu0 0
      %944 = vmatprep.subr.bf16.mxu0 0
      %945 = vmatpush1.bf16.msra.mxu0 0
      %946 = vmatprep.subr.bf16.mxu0 0
      %947 = vmatpush1.bf16.msra.mxu0 %v930
      %948 = vmatprep.subr.bf16.mxu0 0
      %949 = vmatpush2.bf16.msra.mxu0 0
      %950 = vmatprep.subr.bf16.mxu0 0
      %951 = vmatpush2.bf16.msra.mxu0 0
      %952 = vmatprep.subr.bf16.mxu0 0
      %953 = vmatpush2.bf16.msra.mxu0 0
      %954 = vmatprep.subr.bf16.mxu0 0
      %955 = vmatpush2.bf16.msra.mxu0 0
      %956 = vmatprep.subr.bf16.mxu0 0
      %957 = vmatpush2.bf16.msra.mxu0 0
      %958 = vmatprep.subr.bf16.mxu0 0
      %959 = vmatpush2.bf16.msra.mxu0 0
      %960 = vmatprep.subr.bf16.mxu0 0
      %961 = vmatpush2.bf16.msra.mxu0 0
      %962 = vmatprep.subr.bf16.mxu0 0
      %963 = vmatpush2.bf16.msra.mxu0 0
      %964 = vmatprep.mubr.bf16.mxu0 0
      %965 = vmatmul.mubr.bf16.gmra.mxu0 %v918
      %v966 = vpop.f32.mrf.mxu0
      %v967 = vadd.f32 0.0, %v966
      %v968 = vpop.f32.mrf.mxu0
      %v969 = vpop.f32.mrf.mxu0
      %v970 = vadd.f32 0.0, %v969
      %v971 = vpop.f32.mrf.mxu0
      %972 = vmatprep.mubr.bf16.mxu0 0
      %973 = vmatmul.mubr.bf16.gmra.mxu0 %v921
      %v974 = vpop.f32.mrf.mxu0
      %v975 = vadd.f32 0.0, %v974
      %v976 = vpop.f32.mrf.mxu0
      %v977 = vpop.f32.mrf.mxu0
      %v978 = vadd.f32 0.0, %v977
      %v979 = vpop.f32.mrf.mxu0
      %980 = vmatprep.mubr.bf16.mxu0 0
      %981 = vmatmul.mubr.bf16.gmra.mxu0 %v924
      %v982 = vpop.f32.mrf.mxu0
      %v983 = vadd.f32 0.0, %v982
      %v984 = vpop.f32.mrf.mxu0
      %v985 = vpop.f32.mrf.mxu0
      %v986 = vadd.f32 0.0, %v985
      %v987 = vpop.f32.mrf.mxu0
      %988 = vmatprep.mubr.bf16.mxu0 0
      %989 = vmatmul.mubr.bf16.gmra.mxu0 %v927
      %v990 = vpop.f32.mrf.mxu0
      %v991 = vadd.f32 0.0, %v990
      %v992 = vpop.f32.mrf.mxu0
      %v993 = vpop.f32.mrf.mxu0
      %v994 = vadd.f32 0.0, %v993
      %v995 = vpop.f32.mrf.mxu0
      %996 = vdwg.mxu0
      %v997 = vadd.f32 %v879, %v967
      %v998 = vadd.f32 %v880, %v970
      %v999 = vadd.f32 %v881, %v975
      %v1000 = vadd.f32 %v882, %v978
      %v1001 = vadd.f32 %v883, %v983
      %v1002 = vadd.f32 %v884, %v986
      %v1003 = vadd.f32 %v885, %v991
      %v1004 = vadd.f32 %v886, %v994
      %v1005 = vld [vmem:[%s418] sm:$0xf]
      %v1006 = vld [vmem:[%s418 + $0x4] sm:$0xf]
      %v1007 = vld [vmem:[%s418 + $0x8] sm:$0xf]
      %v1008 = vld [vmem:[%s418 + $0xc] sm:$0xf]
      %v1009 = vld [vmem:[%s418 + $0x10] sm:$0xf]
      %v1010 = vld [vmem:[%s418 + $0x14] sm:$0xf]
      %v1011 = vld [vmem:[%s418 + $0x18] sm:$0xf]
      %v1012 = vld [vmem:[%s418 + $0x1c] sm:$0xf]
      %s1013 = scalar_lea.vmem %s6, 10
      %v1014 = vld [vmem:[%s1013] sm:$0x3]
      %v1023 = vunpack.c.l.b16 %v1005
      %v1024 = vunpack.c.l.b16 %v1006
      %v1025 = vunpack.c.l.b16 %v1007
      %v1026 = vunpack.c.l.b16 %v1008
      %v1027 = vunpack.c.l.b16 %v1009
      %v1028 = vunpack.c.l.b16 %v1010
      %v1029 = vunpack.c.l.b16 %v1011
      %v1030 = vunpack.c.l.b16 %v1012
      %v1031 = vpack.c.b16 %v1024, %v1023
      %v1032 = vpack.c.b16 %v1026, %v1025
      %v1033 = vpack.c.b16 %v1028, %v1027
      %v1034 = vpack.c.b16 %v1030, %v1029
      %v1036 = vsel %vm469, %v1031, 0
      %v1039 = vsel %vm469, %v1032, 0
      %v1042 = vsel %vm469, %v1033, 0
      %v1045 = vsel %vm469, %v1034, 0
      %v1048 = vsel %vm482, %v1014, 0
      %1050 = vmatprep.subr.bf16.mxu0 0
      %1051 = vmatpush1.bf16.msra.mxu0 0
      %1052 = vmatprep.subr.bf16.mxu0 0
      %1053 = vmatpush1.bf16.msra.mxu0 0
      %1054 = vmatprep.subr.bf16.mxu0 0
      %1055 = vmatpush1.bf16.msra.mxu0 0
      %1056 = vmatprep.subr.bf16.mxu0 0
      %1057 = vmatpush1.bf16.msra.mxu0 0
      %1058 = vmatprep.subr.bf16.mxu0 0
      %1059 = vmatpush1.bf16.msra.mxu0 0
      %1060 = vmatprep.subr.bf16.mxu0 0
      %1061 = vmatpush1.bf16.msra.mxu0 0
      %1062 = vmatprep.subr.bf16.mxu0 0
      %1063 = vmatpush1.bf16.msra.mxu0 0
      %1064 = vmatprep.subr.bf16.mxu0 0
      %1065 = vmatpush1.bf16.msra.mxu0 %v1048
      %1066 = vmatprep.subr.bf16.mxu0 0
      %1067 = vmatpush2.bf16.msra.mxu0 0
      %1068 = vmatprep.subr.bf16.mxu0 0
      %1069 = vmatpush2.bf16.msra.mxu0 0
      %1070 = vmatprep.subr.bf16.mxu0 0
      %1071 = vmatpush2.bf16.msra.mxu0 0
      %1072 = vmatprep.subr.bf16.mxu0 0
      %1073 = vmatpush2.bf16.msra.mxu0 0
      %1074 = vmatprep.subr.bf16.mxu0 0
      %1075 = vmatpush2.bf16.msra.mxu0 0
      %1076 = vmatprep.subr.bf16.mxu0 0
      %1077 = vmatpush2.bf16.msra.mxu0 0
      %1078 = vmatprep.subr.bf16.mxu0 0
      %1079 = vmatpush2.bf16.msra.mxu0 0
      %1080 = vmatprep.subr.bf16.mxu0 0
      %1081 = vmatpush2.bf16.msra.mxu0 0
      %1082 = vmatprep.mubr.bf16.mxu0 0
      %1083 = vmatmul.mubr.bf16.gmra.mxu0 %v1036
      %v1084 = vpop.f32.mrf.mxu0
      %v1085 = vadd.f32 0.0, %v1084
      %v1086 = vpop.f32.mrf.mxu0
      %v1087 = vpop.f32.mrf.mxu0
      %v1088 = vadd.f32 0.0, %v1087
      %v1089 = vpop.f32.mrf.mxu0
      %1090 = vmatprep.mubr.bf16.mxu0 0
      %1091 = vmatmul.mubr.bf16.gmra.mxu0 %v1039
      %v1092 = vpop.f32.mrf.mxu0
      %v1093 = vadd.f32 0.0, %v1092
      %v1094 = vpop.f32.mrf.mxu0
      %v1095 = vpop.f32.mrf.mxu0
      %v1096 = vadd.f32 0.0, %v1095
      %v1097 = vpop.f32.mrf.mxu0
      %1098 = vmatprep.mubr.bf16.mxu0 0
      %1099 = vmatmul.mubr.bf16.gmra.mxu0 %v1042
      %v1100 = vpop.f32.mrf.mxu0
      %v1101 = vadd.f32 0.0, %v1100
      %v1102 = vpop.f32.mrf.mxu0
      %v1103 = vpop.f32.mrf.mxu0
      %v1104 = vadd.f32 0.0, %v1103
      %v1105 = vpop.f32.mrf.mxu0
      %1106 = vmatprep.mubr.bf16.mxu0 0
      %1107 = vmatmul.mubr.bf16.gmra.mxu0 %v1045
      %v1108 = vpop.f32.mrf.mxu0
      %v1109 = vadd.f32 0.0, %v1108
      %v1110 = vpop.f32.mrf.mxu0
      %v1111 = vpop.f32.mrf.mxu0
      %v1112 = vadd.f32 0.0, %v1111
      %v1113 = vpop.f32.mrf.mxu0
      %1114 = vdwg.mxu0
      %v1115 = vadd.f32 %v997, %v1085
      %v1116 = vadd.f32 %v998, %v1088
      %v1117 = vadd.f32 %v999, %v1093
      %v1118 = vadd.f32 %v1000, %v1096
      %v1119 = vadd.f32 %v1001, %v1101
      %v1120 = vadd.f32 %v1002, %v1104
      %v1121 = vadd.f32 %v1003, %v1109
      %v1122 = vadd.f32 %v1004, %v1112
      %v1123 = vld [vmem:[%s393 + $0x4] sm:$0xf]
      %v1124 = vld [vmem:[%s393 + $0x8] sm:$0xf]
      %v1125 = vld [vmem:[%s393 + $0xc] sm:$0xf]
      %v1126 = vld [vmem:[%s393 + $0x10] sm:$0xf]
      %v1127 = vld [vmem:[%s393 + $0x14] sm:$0xf]
      %v1128 = vld [vmem:[%s393 + $0x18] sm:$0xf]
      %v1129 = vld [vmem:[%s393 + $0x1c] sm:$0xf]
      %v1130 = vld [vmem:[%s393 + $0x20] sm:$0xf]
      %s1131 = scalar_lea.vmem %s6, 12
      %v1132 = vld [vmem:[%s1131] sm:$0x3]
      %v1141 = vunpack.c.l.b16 %v1123
      %v1142 = vunpack.c.l.b16 %v1124
      %v1143 = vunpack.c.l.b16 %v1125
      %v1144 = vunpack.c.l.b16 %v1126
      %v1145 = vunpack.c.l.b16 %v1127
      %v1146 = vunpack.c.l.b16 %v1128
      %v1147 = vunpack.c.l.b16 %v1129
      %v1148 = vunpack.c.l.b16 %v1130
      %v1149 = vpack.c.b16 %v1142, %v1141
      %v1150 = vpack.c.b16 %v1144, %v1143
      %v1151 = vpack.c.b16 %v1146, %v1145
      %v1152 = vpack.c.b16 %v1148, %v1147
      %v1154 = vsel %vm469, %v1149, 0
      %v1157 = vsel %vm469, %v1150, 0
      %v1160 = vsel %vm469, %v1151, 0
      %v1163 = vsel %vm469, %v1152, 0
      %v1166 = vsel %vm482, %v1132, 0
      %1168 = vmatprep.subr.bf16.mxu0 0
      %1169 = vmatpush1.bf16.msra.mxu0 0
      %1170 = vmatprep.subr.bf16.mxu0 0
      %1171 = vmatpush1.bf16.msra.mxu0 0
      %1172 = vmatprep.subr.bf16.mxu0 0
      %1173 = vmatpush1.bf16.msra.mxu0 0
      %1174 = vmatprep.subr.bf16.mxu0 0
      %1175 = vmatpush1.bf16.msra.mxu0 0
      %1176 = vmatprep.subr.bf16.mxu0 0
      %1177 = vmatpush1.bf16.msra.mxu0 0
      %1178 = vmatprep.subr.bf16.mxu0 0
      %1179 = vmatpush1.bf16.msra.mxu0 0
      %1180 = vmatprep.subr.bf16.mxu0 0
      %1181 = vmatpush1.bf16.msra.mxu0 0
      %1182 = vmatprep.subr.bf16.mxu0 0
      %1183 = vmatpush1.bf16.msra.mxu0 %v1166
      %1184 = vmatprep.subr.bf16.mxu0 0
      %1185 = vmatpush2.bf16.msra.mxu0 0
      %1186 = vmatprep.subr.bf16.mxu0 0
      %1187 = vmatpush2.bf16.msra.mxu0 0
      %1188 = vmatprep.subr.bf16.mxu0 0
      %1189 = vmatpush2.bf16.msra.mxu0 0
      %1190 = vmatprep.subr.bf16.mxu0 0
      %1191 = vmatpush2.bf16.msra.mxu0 0
      %1192 = vmatprep.subr.bf16.mxu0 0
      %1193 = vmatpush2.bf16.msra.mxu0 0
      %1194 = vmatprep.subr.bf16.mxu0 0
      %1195 = vmatpush2.bf16.msra.mxu0 0
      %1196 = vmatprep.subr.bf16.mxu0 0
      %1197 = vmatpush2.bf16.msra.mxu0 0
      %1198 = vmatprep.subr.bf16.mxu0 0
      %1199 = vmatpush2.bf16.msra.mxu0 0
      %1200 = vmatprep.mubr.bf16.mxu0 0
      %1201 = vmatmul.mubr.bf16.gmra.mxu0 %v1154
      %v1202 = vpop.f32.mrf.mxu0
      %v1203 = vadd.f32 0.0, %v1202
      %v1204 = vpop.f32.mrf.mxu0
      %v1205 = vpop.f32.mrf.mxu0
      %v1206 = vadd.f32 0.0, %v1205
      %v1207 = vpop.f32.mrf.mxu0
      %1208 = vmatprep.mubr.bf16.mxu0 0
      %1209 = vmatmul.mubr.bf16.gmra.mxu0 %v1157
      %v1210 = vpop.f32.mrf.mxu0
      %v1211 = vadd.f32 0.0, %v1210
      %v1212 = vpop.f32.mrf.mxu0
      %v1213 = vpop.f32.mrf.mxu0
      %v1214 = vadd.f32 0.0, %v1213
      %v1215 = vpop.f32.mrf.mxu0
      %1216 = vmatprep.mubr.bf16.mxu0 0
      %1217 = vmatmul.mubr.bf16.gmra.mxu0 %v1160
      %v1218 = vpop.f32.mrf.mxu0
      %v1219 = vadd.f32 0.0, %v1218
      %v1220 = vpop.f32.mrf.mxu0
      %v1221 = vpop.f32.mrf.mxu0
      %v1222 = vadd.f32 0.0, %v1221
      %v1223 = vpop.f32.mrf.mxu0
      %1224 = vmatprep.mubr.bf16.mxu0 0
      %1225 = vmatmul.mubr.bf16.gmra.mxu0 %v1163
      %v1226 = vpop.f32.mrf.mxu0
      %v1227 = vadd.f32 0.0, %v1226
      %v1228 = vpop.f32.mrf.mxu0
      %v1229 = vpop.f32.mrf.mxu0
      %v1230 = vadd.f32 0.0, %v1229
      %v1231 = vpop.f32.mrf.mxu0
      %1232 = vdwg.mxu0
      %v1233 = vadd.f32 %v1115, %v1203
      %v1234 = vadd.f32 %v1116, %v1206
      %v1235 = vadd.f32 %v1117, %v1211
      %v1236 = vadd.f32 %v1118, %v1214
      %v1237 = vadd.f32 %v1119, %v1219
      %v1238 = vadd.f32 %v1120, %v1222
      %v1239 = vadd.f32 %v1121, %v1227
      %v1240 = vadd.f32 %v1122, %v1230
      %v1241 = vld [vmem:[%s398 + $0x4] sm:$0xf]
      %v1242 = vld [vmem:[%s398 + $0x8] sm:$0xf]
      %v1243 = vld [vmem:[%s398 + $0xc] sm:$0xf]
      %v1244 = vld [vmem:[%s398 + $0x10] sm:$0xf]
      %v1245 = vld [vmem:[%s398 + $0x14] sm:$0xf]
      %v1246 = vld [vmem:[%s398 + $0x18] sm:$0xf]
      %v1247 = vld [vmem:[%s398 + $0x1c] sm:$0xf]
      %v1248 = vld [vmem:[%s398 + $0x20] sm:$0xf]
      %s1249 = scalar_lea.vmem %s6, 14
      %v1250 = vld [vmem:[%s1249] sm:$0x3]
      %v1259 = vunpack.c.l.b16 %v1241
      %v1260 = vunpack.c.l.b16 %v1242
      %v1261 = vunpack.c.l.b16 %v1243
      %v1262 = vunpack.c.l.b16 %v1244
      %v1263 = vunpack.c.l.b16 %v1245
      %v1264 = vunpack.c.l.b16 %v1246
      %v1265 = vunpack.c.l.b16 %v1247
      %v1266 = vunpack.c.l.b16 %v1248
      %v1267 = vpack.c.b16 %v1260, %v1259
      %v1268 = vpack.c.b16 %v1262, %v1261
      %v1269 = vpack.c.b16 %v1264, %v1263
      %v1270 = vpack.c.b16 %v1266, %v1265
      %v1272 = vsel %vm469, %v1267, 0
      %v1275 = vsel %vm469, %v1268, 0
      %v1278 = vsel %vm469, %v1269, 0
      %v1281 = vsel %vm469, %v1270, 0
      %v1284 = vsel %vm482, %v1250, 0
      %1286 = vmatprep.subr.bf16.mxu0 0
      %1287 = vmatpush1.bf16.msra.mxu0 0
      %1288 = vmatprep.subr.bf16.mxu0 0
      %1289 = vmatpush1.bf16.msra.mxu0 0
      %1290 = vmatprep.subr.bf16.mxu0 0
      %1291 = vmatpush1.bf16.msra.mxu0 0
      %1292 = vmatprep.subr.bf16.mxu0 0
      %1293 = vmatpush1.bf16.msra.mxu0 0
      %1294 = vmatprep.subr.bf16.mxu0 0
      %1295 = vmatpush1.bf16.msra.mxu0 0
      %1296 = vmatprep.subr.bf16.mxu0 0
      %1297 = vmatpush1.bf16.msra.mxu0 0
      %1298 = vmatprep.subr.bf16.mxu0 0
      %1299 = vmatpush1.bf16.msra.mxu0 0
      %1300 = vmatprep.subr.bf16.mxu0 0
      %1301 = vmatpush1.bf16.msra.mxu0 %v1284
      %1302 = vmatprep.subr.bf16.mxu0 0
      %1303 = vmatpush2.bf16.msra.mxu0 0
      %1304 = vmatprep.subr.bf16.mxu0 0
      %1305 = vmatpush2.bf16.msra.mxu0 0
      %1306 = vmatprep.subr.bf16.mxu0 0
      %1307 = vmatpush2.bf16.msra.mxu0 0
      %1308 = vmatprep.subr.bf16.mxu0 0
      %1309 = vmatpush2.bf16.msra.mxu0 0
      %1310 = vmatprep.subr.bf16.mxu0 0
      %1311 = vmatpush2.bf16.msra.mxu0 0
      %1312 = vmatprep.subr.bf16.mxu0 0
      %1313 = vmatpush2.bf16.msra.mxu0 0
      %1314 = vmatprep.subr.bf16.mxu0 0
      %1315 = vmatpush2.bf16.msra.mxu0 0
      %1316 = vmatprep.subr.bf16.mxu0 0
      %1317 = vmatpush2.bf16.msra.mxu0 0
      %1318 = vmatprep.mubr.bf16.mxu0 0
      %1319 = vmatmul.mubr.bf16.gmra.mxu0 %v1272
      %v1320 = vpop.f32.mrf.mxu0
      %v1321 = vadd.f32 0.0, %v1320
      %v1322 = vpop.f32.mrf.mxu0
      %v1323 = vpop.f32.mrf.mxu0
      %v1324 = vadd.f32 0.0, %v1323
      %v1325 = vpop.f32.mrf.mxu0
      %1326 = vmatprep.mubr.bf16.mxu0 0
      %1327 = vmatmul.mubr.bf16.gmra.mxu0 %v1275
      %v1328 = vpop.f32.mrf.mxu0
      %v1329 = vadd.f32 0.0, %v1328
      %v1330 = vpop.f32.mrf.mxu0
      %v1331 = vpop.f32.mrf.mxu0
      %v1332 = vadd.f32 0.0, %v1331
      %v1333 = vpop.f32.mrf.mxu0
      %1334 = vmatprep.mubr.bf16.mxu0 0
      %1335 = vmatmul.mubr.bf16.gmra.mxu0 %v1278
      %v1336 = vpop.f32.mrf.mxu0
      %v1337 = vadd.f32 0.0, %v1336
      %v1338 = vpop.f32.mrf.mxu0
      %v1339 = vpop.f32.mrf.mxu0
      %v1340 = vadd.f32 0.0, %v1339
      %v1341 = vpop.f32.mrf.mxu0
      %1342 = vmatprep.mubr.bf16.mxu0 0
      %1343 = vmatmul.mubr.bf16.gmra.mxu0 %v1281
      %v1344 = vpop.f32.mrf.mxu0
      %v1345 = vadd.f32 0.0, %v1344
      %v1346 = vpop.f32.mrf.mxu0
      %v1347 = vpop.f32.mrf.mxu0
      %v1348 = vadd.f32 0.0, %v1347
      %v1349 = vpop.f32.mrf.mxu0
      %1350 = vdwg.mxu0
      %v1351 = vadd.f32 %v1233, %v1321
      %v1352 = vadd.f32 %v1234, %v1324
      %v1353 = vadd.f32 %v1235, %v1329
      %v1354 = vadd.f32 %v1236, %v1332
      %v1355 = vadd.f32 %v1237, %v1337
      %v1356 = vadd.f32 %v1238, %v1340
      %v1357 = vadd.f32 %v1239, %v1345
      %v1358 = vadd.f32 %v1240, %v1348
      %v1359 = vld [vmem:[%s403 + $0x4] sm:$0xf]
      %v1360 = vld [vmem:[%s403 + $0x8] sm:$0xf]
      %v1361 = vld [vmem:[%s403 + $0xc] sm:$0xf]
      %v1362 = vld [vmem:[%s403 + $0x10] sm:$0xf]
      %v1363 = vld [vmem:[%s403 + $0x14] sm:$0xf]
      %v1364 = vld [vmem:[%s403 + $0x18] sm:$0xf]
      %v1365 = vld [vmem:[%s403 + $0x1c] sm:$0xf]
      %v1366 = vld [vmem:[%s403 + $0x20] sm:$0xf]
      %s1367 = scalar_lea.vmem %s6, 16
      %v1368 = vld [vmem:[%s1367] sm:$0x3]
      %v1377 = vunpack.c.l.b16 %v1359
      %v1378 = vunpack.c.l.b16 %v1360
      %v1379 = vunpack.c.l.b16 %v1361
      %v1380 = vunpack.c.l.b16 %v1362
      %v1381 = vunpack.c.l.b16 %v1363
      %v1382 = vunpack.c.l.b16 %v1364
      %v1383 = vunpack.c.l.b16 %v1365
      %v1384 = vunpack.c.l.b16 %v1366
      %v1385 = vpack.c.b16 %v1378, %v1377
      %v1386 = vpack.c.b16 %v1380, %v1379
      %v1387 = vpack.c.b16 %v1382, %v1381
      %v1388 = vpack.c.b16 %v1384, %v1383
      %v1390 = vsel %vm469, %v1385, 0
      %v1393 = vsel %vm469, %v1386, 0
      %v1396 = vsel %vm469, %v1387, 0
      %v1399 = vsel %vm469, %v1388, 0
      %v1402 = vsel %vm482, %v1368, 0
      %1404 = vmatprep.subr.bf16.mxu0 0
      %1405 = vmatpush1.bf16.msra.mxu0 0
      %1406 = vmatprep.subr.bf16.mxu0 0
      %1407 = vmatpush1.bf16.msra.mxu0 0
      %1408 = vmatprep.subr.bf16.mxu0 0
      %1409 = vmatpush1.bf16.msra.mxu0 0
      %1410 = vmatprep.subr.bf16.mxu0 0
      %1411 = vmatpush1.bf16.msra.mxu0 0
      %1412 = vmatprep.subr.bf16.mxu0 0
      %1413 = vmatpush1.bf16.msra.mxu0 0
      %1414 = vmatprep.subr.bf16.mxu0 0
      %1415 = vmatpush1.bf16.msra.mxu0 0
      %1416 = vmatprep.subr.bf16.mxu0 0
      %1417 = vmatpush1.bf16.msra.mxu0 0
      %1418 = vmatprep.subr.bf16.mxu0 0
      %1419 = vmatpush1.bf16.msra.mxu0 %v1402
      %1420 = vmatprep.subr.bf16.mxu0 0
      %1421 = vmatpush2.bf16.msra.mxu0 0
      %1422 = vmatprep.subr.bf16.mxu0 0
      %1423 = vmatpush2.bf16.msra.mxu0 0
      %1424 = vmatprep.subr.bf16.mxu0 0
      %1425 = vmatpush2.bf16.msra.mxu0 0
      %1426 = vmatprep.subr.bf16.mxu0 0
      %1427 = vmatpush2.bf16.msra.mxu0 0
      %1428 = vmatprep.subr.bf16.mxu0 0
      %1429 = vmatpush2.bf16.msra.mxu0 0
      %1430 = vmatprep.subr.bf16.mxu0 0
      %1431 = vmatpush2.bf16.msra.mxu0 0
      %1432 = vmatprep.subr.bf16.mxu0 0
      %1433 = vmatpush2.bf16.msra.mxu0 0
      %1434 = vmatprep.subr.bf16.mxu0 0
      %1435 = vmatpush2.bf16.msra.mxu0 0
      %1436 = vmatprep.mubr.bf16.mxu0 0
      %1437 = vmatmul.mubr.bf16.gmra.mxu0 %v1390
      %v1438 = vpop.f32.mrf.mxu0
      %v1439 = vadd.f32 0.0, %v1438
      %v1440 = vpop.f32.mrf.mxu0
      %v1441 = vpop.f32.mrf.mxu0
      %v1442 = vadd.f32 0.0, %v1441
      %v1443 = vpop.f32.mrf.mxu0
      %1444 = vmatprep.mubr.bf16.mxu0 0
      %1445 = vmatmul.mubr.bf16.gmra.mxu0 %v1393
      %v1446 = vpop.f32.mrf.mxu0
      %v1447 = vadd.f32 0.0, %v1446
      %v1448 = vpop.f32.mrf.mxu0
      %v1449 = vpop.f32.mrf.mxu0
      %v1450 = vadd.f32 0.0, %v1449
      %v1451 = vpop.f32.mrf.mxu0
      %1452 = vmatprep.mubr.bf16.mxu0 0
      %1453 = vmatmul.mubr.bf16.gmra.mxu0 %v1396
      %v1454 = vpop.f32.mrf.mxu0
      %v1455 = vadd.f32 0.0, %v1454
      %v1456 = vpop.f32.mrf.mxu0
      %v1457 = vpop.f32.mrf.mxu0
      %v1458 = vadd.f32 0.0, %v1457
      %v1459 = vpop.f32.mrf.mxu0
      %1460 = vmatprep.mubr.bf16.mxu0 0
      %1461 = vmatmul.mubr.bf16.gmra.mxu0 %v1399
      %v1462 = vpop.f32.mrf.mxu0
      %v1463 = vadd.f32 0.0, %v1462
      %v1464 = vpop.f32.mrf.mxu0
      %v1465 = vpop.f32.mrf.mxu0
      %v1466 = vadd.f32 0.0, %v1465
      %v1467 = vpop.f32.mrf.mxu0
      %1468 = vdwg.mxu0
      %v1469 = vadd.f32 %v1351, %v1439
      %v1470 = vadd.f32 %v1352, %v1442
      %v1471 = vadd.f32 %v1353, %v1447
      %v1472 = vadd.f32 %v1354, %v1450
      %v1473 = vadd.f32 %v1355, %v1455
      %v1474 = vadd.f32 %v1356, %v1458
      %v1475 = vadd.f32 %v1357, %v1463
      %v1476 = vadd.f32 %v1358, %v1466
      %v1477 = vld [vmem:[%s7] sm:$0x1]
      %v1479 = vlaneseq
      %v1480 = vshrl.u32 %v1479, 7
      %v1481 = vsub.s32 0, %v1480
      %v1482 = vrot.slane %v1477, %v1481
      %v1484 = vadd.f32 %v1469, %v1482
      %v1485 = vadd.f32 %v1470, %v1482
      %v1486 = vadd.f32 %v1471, %v1482
      %v1487 = vadd.f32 %v1472, %v1482
      %v1488 = vadd.f32 %v1473, %v1482
      %v1489 = vadd.f32 %v1474, %v1482
      %v1490 = vadd.f32 %v1475, %v1482
      %v1491 = vadd.f32 %v1476, %v1482
      %vm1492 = vcmask 130048
      %1493 = vst.msk [vmem:[%s427] sm:$0xff] %vm1492, %v1484
      %1494 = vst.msk [vmem:[%s427 + $0x8] sm:$0xff] %vm1492, %v1485
      %1495 = vst.msk [vmem:[%s427 + $0x10] sm:$0xff] %vm1492, %v1486
      %1496 = vst.msk [vmem:[%s427 + $0x18] sm:$0xff] %vm1492, %v1487
      %1497 = vst.msk [vmem:[%s427 + $0x20] sm:$0xff] %vm1492, %v1488
      %1498 = vst.msk [vmem:[%s427 + $0x28] sm:$0xff] %vm1492, %v1489
      %1499 = vst.msk [vmem:[%s427 + $0x30] sm:$0xff] %vm1492, %v1490
      %1500 = vst.msk [vmem:[%s427 + $0x38] sm:$0xff] %vm1492, %v1491
      %s1501 = smul.u32 8, %s24
      %p1502 = scmp.lt.s32.totalorder %s23, 1
      %s1503 = scalar_select %p1502, %s23, 1
      %p1504 = scmp.lt.s32.totalorder %s1501, 7
      %s1505 = scalar_select %p1504, %s1501, 7
      %s1506 = smul.addr %s1503, 8
      %s1507 = sadd.s32 %s1505, %s1506
      %s1508 = smul.addr %s1507, 8
      %s1509 = scalar_lea.vmem %s8, %s1508
      // Predicated region
      $region53: #{conv_tokenizer_forward.2} parent=51 // pred_check
        %p1510 = pneg %p249
      $region54: #{conv_tokenizer_forward.2} parent=51 // pred_check_branch
        %1512 = sbr.rel (%p1510) target = $region56
      $region55: #{conv_tokenizer_forward.2} parent=51 // pred_region
        %s1513 = smul.u32 8, %s24
      $region56: #{conv_tokenizer_forward.2} parent=51 // pred_fallthru
        _
    $region52: #{conv_tokenizer_forward.2} parent=5 // pred_fallthru
      _
    %p1514 = scmp.le.s32.totalorder 2, %s14
    // Predicated region
    $region57: #{conv_tokenizer_forward.2} parent=5 // pred_check
      %p1515 = pneg %p1514
    $region58: #{conv_tokenizer_forward.2} parent=5 // pred_check_branch
      %1517 = sbr.rel (%p1515) target = $region60
    $region59: #{conv_tokenizer_forward.2} parent=5 // pred_region
      %s1518 = ssub.s32 %s14, 2
      // Predicated region
      $region61: #{conv_tokenizer_forward.2} parent=59 // pred_check
        %p1519 = pneg %p255
      $region62: #{conv_tokenizer_forward.2} parent=59 // pred_check_branch
        %1521 = sbr.rel (%p1519) target = $region64
      $region63: #{conv_tokenizer_forward.2} parent=59 // pred_region
        %s1522 = smul.u32 8, %s26
        %p1523 = scmp.lt.s32.totalorder %s25, 1
        %s1524 = scalar_select %p1523, %s25, 1
        %p1525 = scmp.lt.s32.totalorder %s1522, 7
        %s1526 = scalar_select %p1525, %s1522, 7
        %s1527 = smul.addr %s1524, 8
        %s1528 = sadd.s32 %s1526, %s1527
        %s1529 = smul.addr %s1528, 8
        %s1530 = scalar_lea.vmem %s8, %s1529
      $region64: #{conv_tokenizer_forward.2} parent=59 // pred_fallthru
        _
    $region60: #{conv_tokenizer_forward.2} parent=5 // pred_fallthru
      _
  $region6: #{conv_tokenizer_forward.2} parent=0 // loop_footer
    %s18 = sadd.s32 1, %s14
  $region7: #{conv_tokenizer_forward.2} parent=0 // loop_footer_branch
    %13 = sbr.rel target = $region3
  $region8: #{conv_tokenizer_forward.2} parent=0 // loop_exit
    _

// kernel: conv_tokenizer_forward.3
$region0: #{conv_tokenizer_forward.3}
  #allocation0 [shape = 'u32[]', space=smem, size = 0x4, offset = 0x4, fixed_abs, tag = 'smem constant byte address 0x4 - core index']
  #allocation1 [shape = 'u32[144,128]{1,0:T(1,128)}', space=vmem, size = 0x12000, scoped, tag = 'internal scratch']
  %s0 = inlined_call_operand.vmem [shape: bf16[2,20,16], index: 0, kind: input, shape index: {}]
  %s1 = inlined_call_operand.vmem [shape: bf16[2,20,16], index: 1, kind: input, shape index: {}]
  %s2 = inlined_call_operand.vmem [shape: bf16[2,20,16], index: 2, kind: input, shape index: {}]
  %s3 = inlined_call_operand.vmem [shape: bf16[2,16,16], index: 3, kind: input, shape index: {}]
  %s4 = inlined_call_operand.vmem [shape: bf16[2,16,16], index: 4, kind: input, shape index: {}]
  %s5 = inlined_call_operand.vmem [shape: bf16[2,16,16], index: 5, kind: input, shape index: {}]
  %s6 = inlined_call_operand.vmem [shape: bf16[9,16,32], index: 6, kind: input, shape index: {}]
  %s7 = inlined_call_operand.vmem [shape: f32[1,32], index: 7, kind: input, shape index: {}]
  %s8 = inlined_call_operand.hbm [shape: f32[2,16,32], index: 8, kind: output, shape index: {}]
  %s9 = sld [smem:[#allocation0]]
  $region65: #{conv_tokenizer_forward.3} parent=0
    _
  %s11 = ssub.s32 1, %s9
  %s12 = scalar_select 0, %s11, %s9
  $region1: #{conv_tokenizer_forward.3} parent=0
    #allocation2 [shape = 'u8[16384]{0}', space=vmem, size = 0x4000, scoped, tag = 'output window, operand 0']
    #allocation3 [shape = 's32[2]{0}', space=sflag, size = 0x8, scoped, tag = 'scoped memory for conv_tokenizer_forward.3']
    %13 = vsyncpa [#allocation3], 0
    %s14 = scalar_lea.sflag [#allocation3], 1
    %15 = vsyncpa %s14, 0
    loop: start=0, step=1, limit=4
    $region2: #{conv_tokenizer_forward.3} parent=1 // loop_pre_header
      _
    $region3: #{conv_tokenizer_forward.3} parent=1 // loop_header
      %s17 = sphi 0, %s21
      %p18 = scmp.ge.s32.totalorder %s17, 4
      %s24 = sphi 0, %s36
      %s25 = sphi 0, %s32
      %s26 = sphi 0, %s24
      %s27 = sphi 0, %s25
      %s28 = sphi 0, %s26
      %s29 = sphi 0, %s27
      %s39 = sphi 0, %s41
      %s42 = sphi 0, %s39
      %s43 = sphi 0, %s42
      %s59 = sphi 0, %s43
      %s65 = sphi 0, %s67
      %s68 = sphi 0, %s65
      %s69 = sphi 0, %s68
      %s85 = sphi 0, %s69
      %s91 = sphi 0, %s93
      %s94 = sphi 0, %s91
      %s95 = sphi 0, %s94
      %s111 = sphi 0, %s95
      %s117 = sphi 0, %s119
      %s120 = sphi 0, %s117
      %s121 = sphi 0, %s120
      %s137 = sphi 0, %s121
      %s143 = sphi 0, %s145
      %s146 = sphi 0, %s143
      %s147 = sphi 0, %s146
      %s163 = sphi 0, %s147
      %s169 = sphi 0, %s171
      %s172 = sphi 0, %s169
      %s173 = sphi 0, %s172
      %s189 = sphi 0, %s173
      %s193 = sphi 0, %s193
      %s195 = sphi 0, %s193
      %s196 = sphi 0, %s195
      %s210 = sphi 0, %s196
      %s214 = sphi 0, %s214
      %s216 = sphi 0, %s214
      %s217 = sphi 0, %s216
      %s231 = sphi 0, %s217
      %s239 = sphi 0, %s241
      %s242 = sphi 0, %s239
      %s243 = sphi 0, %s242
      %s259 = sphi 0, %s243
    $region4: #{conv_tokenizer_forward.3} parent=1 // loop_header_branch
      %20 = sbr.rel (%p18) target = $region8
    $region5: #{conv_tokenizer_forward.3} parent=1 // loop_body
      %s22 = ssub.s32 %s17, 1
      %s23 = ssub.s32 %s17, 2
      %s30 = sadd.s32 1, %s25
      %p31 = scmp.ge.s32.totalorder %s30, 1
      %s32 = scalar_select %p31, 0, %s30
      %s33 = sadd.s32 1, %s24
      %s34 = scalar_select %p31, %s33, %s24
      %p35 = scmp.ge.s32.totalorder %s34, 2
      %s36 = scalar_select %p35, 0, %s34
      %s37 = ssub.s32 %s24, %s36
      %p38 = scmp.eq.s32.totalorder %s37, 0
      %s40 = sadd.s32 %s39, 1
      %s41 = scalar_select %p38, %s39, %s40
      %p44 = pneg %p38
      %p45 = scmp.eq.s32.totalorder %s17, 1
      %p46 = por %p44, %p45
      %p47 = scmp.ne.s32.totalorder %s39, %s42
      %p48 = scmp.eq.s32.totalorder %s17, 0
      %p49 = por %p47, %p48
      %p50 = scmp.ne.s32.totalorder %s39, %s42
      %p51 = scmp.eq.s32.totalorder %s22, 1
      %p52 = por %p50, %p51
      %p53 = scmp.ne.s32.totalorder %s42, %s43
      %p54 = scmp.eq.s32.totalorder %s22, 0
      %p55 = por %p53, %p54
      %p56 = scmp.ne.s32.totalorder %s42, %s43
      %p57 = scmp.eq.s32.totalorder %s23, 1
      %p58 = por %p56, %p57
      %p60 = scmp.ne.s32.totalorder %s43, %s59
      %p61 = scmp.eq.s32.totalorder %s23, 0
      %p62 = por %p60, %p61
      %s63 = ssub.s32 %s24, %s36
      %p64 = scmp.eq.s32.totalorder %s63, 0
      %s66 = sadd.s32 %s65, 1
      %s67 = scalar_select %p64, %s65, %s66
      %p70 = pneg %p64
      %p71 = scmp.eq.s32.totalorder %s17, 1
      %p72 = por %p70, %p71
      %p73 = scmp.ne.s32.totalorder %s65, %s68
      %p74 = scmp.eq.s32.totalorder %s17, 0
      %p75 = por %p73, %p74
      %p76 = scmp.ne.s32.totalorder %s65, %s68
      %p77 = scmp.eq.s32.totalorder %s22, 1
      %p78 = por %p76, %p77
      %p79 = scmp.ne.s32.totalorder %s68, %s69
      %p80 = scmp.eq.s32.totalorder %s22, 0
      %p81 = por %p79, %p80
      %p82 = scmp.ne.s32.totalorder %s68, %s69
      %p83 = scmp.eq.s32.totalorder %s23, 1
      %p84 = por %p82, %p83
      %p86 = scmp.ne.s32.totalorder %s69, %s85
      %p87 = scmp.eq.s32.totalorder %s23, 0
      %p88 = por %p86, %p87
      %s89 = ssub.s32 %s24, %s36
      %p90 = scmp.eq.s32.totalorder %s89, 0
      %s92 = sadd.s32 %s91, 1
      %s93 = scalar_select %p90, %s91, %s92
      %p96 = pneg %p90
      %p97 = scmp.eq.s32.totalorder %s17, 1
      %p98 = por %p96, %p97
      %p99 = scmp.ne.s32.totalorder %s91, %s94
      %p100 = scmp.eq.s32.totalorder %s17, 0
      %p101 = por %p99, %p100
      %p102 = scmp.ne.s32.totalorder %s91, %s94
      %p103 = scmp.eq.s32.totalorder %s22, 1
      %p104 = por %p102, %p103
      %p105 = scmp.ne.s32.totalorder %s94, %s95
      %p106 = scmp.eq.s32.totalorder %s22, 0
      %p107 = por %p105, %p106
      %p108 = scmp.ne.s32.totalorder %s94, %s95
      %p109 = scmp.eq.s32.totalorder %s23, 1
      %p110 = por %p108, %p109
      %p112 = scmp.ne.s32.totalorder %s95, %s111
      %p113 = scmp.eq.s32.totalorder %s23, 0
      %p114 = por %p112, %p113
      %s115 = ssub.s32 %s24, %s36
      %p116 = scmp.eq.s32.totalorder %s115, 0
      %s118 = sadd.s32 %s117, 1
      %s119 = scalar_select %p116, %s117, %s118
      %p122 = pneg %p116
      %p123 = scmp.eq.s32.totalorder %s17, 1
      %p124 = por %p122, %p123
      %p125 = scmp.ne.s32.totalorder %s117, %s120
      %p126 = scmp.eq.s32.totalorder %s17, 0
      %p127 = por %p125, %p126
      %p128 = scmp.ne.s32.totalorder %s117, %s120
      %p129 = scmp.eq.s32.totalorder %s22, 1
      %p130 = por %p128, %p129
      %p131 = scmp.ne.s32.totalorder %s120, %s121
      %p132 = scmp.eq.s32.totalorder %s22, 0
      %p133 = por %p131, %p132
      %p134 = scmp.ne.s32.totalorder %s120, %s121
      %p135 = scmp.eq.s32.totalorder %s23, 1
      %p136 = por %p134, %p135
      %p138 = scmp.ne.s32.totalorder %s121, %s137
      %p139 = scmp.eq.s32.totalorder %s23, 0
      %p140 = por %p138, %p139
      %s141 = ssub.s32 %s24, %s36
      %p142 = scmp.eq.s32.totalorder %s141, 0
      %s144 = sadd.s32 %s143, 1
      %s145 = scalar_select %p142, %s143, %s144
      %p148 = pneg %p142
      %p149 = scmp.eq.s32.totalorder %s17, 1
      %p150 = por %p148, %p149
      %p151 = scmp.ne.s32.totalorder %s143, %s146
      %p152 = scmp.eq.s32.totalorder %s17, 0
      %p153 = por %p151, %p152
      %p154 = scmp.ne.s32.totalorder %s143, %s146
      %p155 = scmp.eq.s32.totalorder %s22, 1
      %p156 = por %p154, %p155
      %p157 = scmp.ne.s32.totalorder %s146, %s147
      %p158 = scmp.eq.s32.totalorder %s22, 0
      %p159 = por %p157, %p158
      %p160 = scmp.ne.s32.totalorder %s146, %s147
      %p161 = scmp.eq.s32.totalorder %s23, 1
      %p162 = por %p160, %p161
      %p164 = scmp.ne.s32.totalorder %s147, %s163
      %p165 = scmp.eq.s32.totalorder %s23, 0
      %p166 = por %p164, %p165
      %s167 = ssub.s32 %s24, %s36
      %p168 = scmp.eq.s32.totalorder %s167, 0
      %s170 = sadd.s32 %s169, 1
      %s171 = scalar_select %p168, %s169, %s170
      %p174 = pneg %p168
      %p175 = scmp.eq.s32.totalorder %s17, 1
      %p176 = por %p174, %p175
      %p177 = scmp.ne.s32.totalorder %s169, %s172
      %p178 = scmp.eq.s32.totalorder %s17, 0
      %p179 = por %p177, %p178
      %p180 = scmp.ne.s32.totalorder %s169, %s172
      %p181 = scmp.eq.s32.totalorder %s22, 1
      %p182 = por %p180, %p181
      %p183 = scmp.ne.s32.totalorder %s172, %s173
      %p184 = scmp.eq.s32.totalorder %s22, 0
      %p185 = por %p183, %p184
      %p186 = scmp.ne.s32.totalorder %s172, %s173
      %p187 = scmp.eq.s32.totalorder %s23, 1
      %p188 = por %p186, %p187
      %p190 = scmp.ne.s32.totalorder %s173, %s189
      %p191 = scmp.eq.s32.totalorder %s23, 0
      %p192 = por %p190, %p191
      %s194 = sadd.s32 %s193, 1
      %p197 = scmp.eq.s32.totalorder %s17, 1
      %p198 = scmp.ne.s32.totalorder %s193, %s195
      %p199 = scmp.eq.s32.totalorder %s17, 0
      %p200 = por %p198, %p199
      %p201 = scmp.ne.s32.totalorder %s193, %s195
      %p202 = scmp.eq.s32.totalorder %s22, 1
      %p203 = por %p201, %p202
      %p204 = scmp.ne.s32.totalorder %s195, %s196
      %p205 = scmp.eq.s32.totalorder %s22, 0
      %p206 = por %p204, %p205
      %p207 = scmp.ne.s32.totalorder %s195, %s196
      %p208 = scmp.eq.s32.totalorder %s23, 1
      %p209 = por %p207, %p208
      %p211 = scmp.ne.s32.totalorder %s196, %s210
      %p212 = scmp.eq.s32.totalorder %s23, 0
      %p213 = por %p211, %p212
      %s215 = sadd.s32 %s214, 1
      %p218 = scmp.eq.s32.totalorder %s17, 1
      %p219 = scmp.ne.s32.totalorder %s214, %s216
      %p220 = scmp.eq.s32.totalorder %s17, 0
      %p221 = por %p219, %p220
      %p222 = scmp.ne.s32.totalorder %s214, %s216
      %p223 = scmp.eq.s32.totalorder %s22, 1
      %p224 = por %p222, %p223
      %p225 = scmp.ne.s32.totalorder %s216, %s217
      %p226 = scmp.eq.s32.totalorder %s22, 0
      %p227 = por %p225, %p226
      %p228 = scmp.ne.s32.totalorder %s216, %s217
      %p229 = scmp.eq.s32.totalorder %s23, 1
      %p230 = por %p228, %p229
      %p232 = scmp.ne.s32.totalorder %s217, %s231
      %p233 = scmp.eq.s32.totalorder %s23, 0
      %p234 = por %p232, %p233
      %s235 = ssub.s32 %s24, %s36
      %s236 = ssub.s32 %s25, %s32
      %s237 = sor.u32 %s235, %s236
      %p238 = scmp.eq.s32.totalorder %s237, 0
      %s240 = sadd.s32 %s239, 1
      %s241 = scalar_select %p238, %s239, %s240
      %p244 = pneg %p238
      %p245 = scmp.eq.s32.totalorder %s17, 1
      %p246 = por %p244, %p245
      %p247 = scmp.ne.s32.totalorder %s239, %s242
      %p248 = scmp.eq.s32.totalorder %s17, 0
      %p249 = por %p247, %p248
      %p250 = scmp.ne.s32.totalorder %s239, %s242
      %p251 = scmp.eq.s32.totalorder %s22, 1
      %p252 = por %p250, %p251
      %p253 = scmp.ne.s32.totalorder %s242, %s243
      %p254 = scmp.eq.s32.totalorder %s22, 0
      %p255 = por %p253, %p254
      %p256 = scmp.ne.s32.totalorder %s242, %s243
      %p257 = scmp.eq.s32.totalorder %s23, 1
      %p258 = por %p256, %p257
      %p260 = scmp.ne.s32.totalorder %s243, %s259
      %p261 = scmp.eq.s32.totalorder %s23, 0
      %p262 = por %p260, %p261
      %p263 = scmp.le.s32.totalorder 1, %s17
      %p264 = scmp.lt.s32.totalorder %s17, 3
      %p265 = pnand %p263, %p264
      %p266 = pneg %p265
      // Predicated region
      $region9: #{conv_tokenizer_forward.3} parent=5 // pred_check
        _
      $region10: #{conv_tokenizer_forward.3} parent=5 // pred_check_branch
        %268 = sbr.rel (%p265) target = $region12
      $region11: #{conv_tokenizer_forward.3} parent=5 // pred_region
        %s269 = ssub.s32 %s17, 1
        // Predicated region
        $region13: #{conv_tokenizer_forward.3} parent=11 // pred_check
          %p270 = pneg %p206
        $region14: #{conv_tokenizer_forward.3} parent=11 // pred_check_branch
          %272 = sbr.rel (%p270) target = $region16
        $region15: #{conv_tokenizer_forward.3} parent=11 // pred_region
          _
        $region16: #{conv_tokenizer_forward.3} parent=11 // pred_fallthru
          _
        // Predicated region
        $region17: #{conv_tokenizer_forward.3} parent=11 // pred_check
          %p273 = pneg %p227
        $region18: #{conv_tokenizer_forward.3} parent=11 // pred_check_branch
          %275 = sbr.rel (%p273) target = $region20
        $region19: #{conv_tokenizer_forward.3} parent=11 // pred_region
          _
        $region20: #{conv_tokenizer_forward.3} parent=11 // pred_fallthru
          _
      $region12: #{conv_tokenizer_forward.3} parent=5 // pred_fallthru
        _
      %p276 = scmp.lt.s32.totalorder %s17, 2
      // Predicated region
      $region21: #{conv_tokenizer_forward.3} parent=5 // pred_check
        %p277 = pneg %p276
      $region22: #{conv_tokenizer_forward.3} parent=5 // pred_check_branch
        %279 = sbr.rel (%p277) target = $region24
      $region23: #{conv_tokenizer_forward.3} parent=5 // pred_region
        // Predicated region
        $region25: #{conv_tokenizer_forward.3} parent=23 // pred_check
          %p280 = pneg %p49
        $region26: #{conv_tokenizer_forward.3} parent=23 // pred_check_branch
          %282 = sbr.rel (%p280) target = $region28
        $region27: #{conv_tokenizer_forward.3} parent=23 // pred_region
          %p283 = scmp.lt.s32.totalorder %s24, 1
          %s284 = scalar_select %p283, %s24, 1
          %s285 = smul.addr %s284, 3
          %s286 = smul.addr %s285, 4
          %s287 = scalar_lea.vmem %s0, %s286
        $region28: #{conv_tokenizer_forward.3} parent=23 // pred_fallthru
          _
        // Predicated region
        $region29: #{conv_tokenizer_forward.3} parent=23 // pred_check
          %p288 = pneg %p75
        $region30: #{conv_tokenizer_forward.3} parent=23 // pred_check_branch
          %290 = sbr.rel (%p288) target = $region32
        $region31: #{conv_tokenizer_forward.3} parent=23 // pred_region
          %p291 = scmp.lt.s32.totalorder %s24, 1
          %s292 = scalar_select %p291, %s24, 1
          %s293 = smul.addr %s292, 3
          %s294 = smul.addr %s293, 4
          %s295 = scalar_lea.vmem %s1, %s294
        $region32: #{conv_tokenizer_forward.3} parent=23 // pred_fallthru
          _
        // Predicated region
        $region33: #{conv_tokenizer_forward.3} parent=23 // pred_check
          %p296 = pneg %p101
        $region34: #{conv_tokenizer_forward.3} parent=23 // pred_check_branch
          %298 = sbr.rel (%p296) target = $region36
        $region35: #{conv_tokenizer_forward.3} parent=23 // pred_region
          %p299 = scmp.lt.s32.totalorder %s24, 1
          %s300 = scalar_select %p299, %s24, 1
          %s301 = smul.addr %s300, 3
          %s302 = smul.addr %s301, 4
          %s303 = scalar_lea.vmem %s2, %s302
        $region36: #{conv_tokenizer_forward.3} parent=23 // pred_fallthru
          _
        // Predicated region
        $region37: #{conv_tokenizer_forward.3} parent=23 // pred_check
          %p304 = pneg %p127
        $region38: #{conv_tokenizer_forward.3} parent=23 // pred_check_branch
          %306 = sbr.rel (%p304) target = $region40
        $region39: #{conv_tokenizer_forward.3} parent=23 // pred_region
          %p307 = scmp.lt.s32.totalorder %s24, 1
          %s308 = scalar_select %p307, %s24, 1
          %s309 = smul.addr %s308, 2
          %s310 = smul.addr %s309, 4
          %s311 = scalar_lea.vmem %s3, %s310
        $region40: #{conv_tokenizer_forward.3} parent=23 // pred_fallthru
          _
        // Predicated region
        $region41: #{conv_tokenizer_forward.3} parent=23 // pred_check
          %p312 = pneg %p153
        $region42: #{conv_tokenizer_forward.3} parent=23 // pred_check_branch
          %314 = sbr.rel (%p312) target = $region44
        $region43: #{conv_tokenizer_forward.3} parent=23 // pred_region
          %p315 = scmp.lt.s32.totalorder %s24, 1
          %s316 = scalar_select %p315, %s24, 1
          %s317 = smul.addr %s316, 2
          %s318 = smul.addr %s317, 4
          %s319 = scalar_lea.vmem %s4, %s318
        $region44: #{conv_tokenizer_forward.3} parent=23 // pred_fallthru
          _
        // Predicated region
        $region45: #{conv_tokenizer_forward.3} parent=23 // pred_check
          %p320 = pneg %p179
        $region46: #{conv_tokenizer_forward.3} parent=23 // pred_check_branch
          %322 = sbr.rel (%p320) target = $region48
        $region47: #{conv_tokenizer_forward.3} parent=23 // pred_region
          %p323 = scmp.lt.s32.totalorder %s24, 1
          %s324 = scalar_select %p323, %s24, 1
          %s325 = smul.addr %s324, 2
          %s326 = smul.addr %s325, 4
          %s327 = scalar_lea.vmem %s5, %s326
        $region48: #{conv_tokenizer_forward.3} parent=23 // pred_fallthru
          _
      $region24: #{conv_tokenizer_forward.3} parent=5 // pred_fallthru
        _
      %p328 = scmp.le.s32.totalorder 1, %s17
      %p329 = scmp.lt.s32.totalorder %s17, 3
      %p330 = pnand %p328, %p329
      %p331 = pneg %p330
      // Predicated region
      $region49: #{conv_tokenizer_forward.3} parent=5 // pred_check
        _
      $region50: #{conv_tokenizer_forward.3} parent=5 // pred_check_branch
        %333 = sbr.rel (%p330) target = $region52
      $region51: #{conv_tokenizer_forward.3} parent=5 // pred_region
        %s334 = ssub.s32 %s17, 1
        %p335 = scmp.lt.s32.totalorder %s26, 1
        %s336 = scalar_select %p335, %s26, 1
        %s337 = smul.addr %s336, 3
        %s338 = smul.addr %s337, 4
        %s339 = scalar_lea.vmem %s0, %s338
        %p340 = pneg %p55
        %p341 = pneg %p52
        %p342 = scmp.lt.s32.totalorder %s26, 1
        %s343 = scalar_select %p342, %s26, 1
        %s344 = smul.addr %s343, 3
        %s345 = smul.addr %s344, 4
        %s346 = scalar_lea.vmem %s1, %s345
        %p347 = pneg %p81
        %p348 = pneg %p78
        %p349 = scmp.lt.s32.totalorder %s26, 1
        %s350 = scalar_select %p349, %s26, 1
        %s351 = smul.addr %s350, 3
        %s352 = smul.addr %s351, 4
        %s353 = scalar_lea.vmem %s2, %s352
        %p354 = pneg %p107
        %p355 = pneg %p104
        %p356 = scmp.lt.s32.totalorder %s26, 1
        %s357 = scalar_select %p356, %s26, 1
        %s358 = smul.addr %s357, 2
        %s359 = smul.addr %s358, 4
        %s360 = scalar_lea.vmem %s3, %s359
        %p361 = pneg %p133
        %p362 = pneg %p130
        %p363 = scmp.lt.s32.totalorder %s26, 1
        %s364 = scalar_select %p363, %s26, 1
        %s365 = smul.addr %s364, 2
        %s366 = smul.addr %s365, 4
        %s367 = scalar_lea.vmem %s4, %s366
        %p368 = pneg %p159
        %p369 = pneg %p156
        %p370 = scmp.lt.s32.totalorder %s26, 1
        %s371 = scalar_select %p370, %s26, 1
        %s372 = smul.addr %s371, 2
        %s373 = smul.addr %s372, 4
        %s374 = scalar_lea.vmem %s5, %s373
        %p375 = pneg %p185
        %p376 = pneg %p182
        %p377 = pneg %p206
        %p378 = pneg %p203
        %p379 = pneg %p227
        %p380 = pneg %p224
        %p381 = pneg %p255
        %p382 = pneg %p252
        %s383 = sand.u32 %s242, 1
        %s384 = scalar_lea.sflag [#allocation3], %s383
        %s385 = sand.u32 %s242, 1
        %s386 = smul.addr %s385, 16
        %s387 = scalar_lea.vmem [#allocation2], %s386
        %p388 = scmp.lt.s32.totalorder %s26, 1
        %s389 = scalar_select %p388, %s26, 1
        %s390 = smul.addr %s389, 3
        %s391 = smul.addr %s390, 4
        %s392 = scalar_lea.vmem %s0, %s391
        %p393 = scmp.lt.s32.totalorder %s26, 1
        %s394 = scalar_select %p393, %s26, 1
        %s395 = smul.addr %s394, 3
        %s396 = smul.addr %s395, 4
        %s397 = scalar_lea.vmem %s1, %s396
        %p398 = scmp.lt.s32.totalorder %s26, 1
        %s399 = scalar_select %p398, %s26, 1
        %s400 = smul.addr %s399, 3
        %s401 = smul.addr %s400, 4
        %s402 = scalar_lea.vmem %s2, %s401
        %p403 = scmp.lt.s32.totalorder %s26, 1
        %s404 = scalar_select %p403, %s26, 1
        %s405 = smul.addr %s404, 2
        %s406 = smul.addr %s405, 4
        %s407 = scalar_lea.vmem %s3, %s406
        %p408 = scmp.lt.s32.totalorder %s26, 1
        %s409 = scalar_select %p408, %s26, 1
        %s410 = smul.addr %s409, 2
        %s411 = smul.addr %s410, 4
        %s412 = scalar_lea.vmem %s4, %s411
        %p413 = scmp.lt.s32.totalorder %s26, 1
        %s414 = scalar_select %p413, %s26, 1
        %s415 = smul.addr %s414, 2
        %s416 = smul.addr %s415, 4
        %s417 = scalar_lea.vmem %s5, %s416
        %s418 = smul.u32 2, %s27
        %v420 = vld [vmem:[%s392] sm:$0xf]
        %v421 = vld [vmem:[%s392 + $0x4] sm:$0xf]
        %v422 = vld [vmem:[%s6] sm:$0xf]
        %v423 = vld [vmem:[%s6 + $0x4] sm:$0xf]
        %v424 = vld [vmem:[%s397] sm:$0xf]
        %v425 = vld [vmem:[%s397 + $0x4] sm:$0xf]
        %s426 = scalar_lea.vmem %s6, 8
        %v427 = vld [vmem:[%s426] sm:$0xf]
        %v428 = vld [vmem:[%s426 + $0x4] sm:$0xf]
        %v431 = vunpack.c.l.b16 %v424
        %v432 = vunpack.c.l.b16 %v425
        %v433 = vpack.c.b16 %v432, %v431
        %v436 = vunpack.c.l.b16 %v427
        %v437 = vunpack.c.l.b16 %v428
        %v438 = vpack.c.b16 %v437, %v436
        %vm440 = vcmask 130048
        %v442 = vsel %vm440, %v433, 0
        %444 = vmatprep.subr.bf16.mxu0 0
        %445 = vmatpush1.bf16.msra.mxu0 0
        %446 = vmatprep.subr.bf16.mxu0 0
        %447 = vmatpush1.bf16.msra.mxu0 0
        %448 = vmatprep.subr.bf16.mxu0 0
        %449 = vmatpush1.bf16.msra.mxu0 0
        %450 = vmatprep.subr.bf16.mxu0 0
        %451 = vmatpush1.bf16.msra.mxu0 0
        %452 = vmatprep.subr.bf16.mxu0 0
        %453 = vmatpush1.bf16.msra.mxu0 0
        %454 = vmatprep.subr.bf16.mxu0 0
        %455 = vmatpush1.bf16.msra.mxu0 0
        %456 = vmatprep.subr.bf16.mxu0 0
        %457 = vmatpush1.bf16.msra.mxu0 0
        %458 = vmatprep.subr.bf16.mxu0 0
        %459 = vmatpush1.bf16.msra.mxu0 %v438
        %460 = vmatprep.subr.bf16.mxu0 0
        %461 = vmatpush2.bf16.msra.mxu0 0
        %462 = vmatprep.subr.bf16.mxu0 0
        %463 = vmatpush2.bf16.msra.mxu0 0
        %464 = vmatprep.subr.bf16.mxu0 0
        %465 = vmatpush2.bf16.msra.mxu0 0
        %466 = vmatprep.subr.bf16.mxu0 0
        %467 = vmatpush2.bf16.msra.mxu0 0
        %468 = vmatprep.subr.bf16.mxu0 0
        %469 = vmatpush2.bf16.msra.mxu0 0
        %470 = vmatprep.subr.bf16.mxu0 0
        %471 = vmatpush2.bf16.msra.mxu0 0
        %472 = vmatprep.subr.bf16.mxu0 0
        %473 = vmatpush2.bf16.msra.mxu0 0
        %474 = vmatprep.subr.bf16.mxu0 0
        %475 = vmatpush2.bf16.msra.mxu0 0
        %476 = vmatprep.mubr.bf16.mxu0 0
        %477 = vmatmul.mubr.bf16.gmra.mxu0 %v442
        %v478 = vpop.f32.mrf.mxu0
        %v479 = vadd.f32 0.0, %v478
        %v480 = vpop.f32.mrf.mxu0
        %v481 = vpop.f32.mrf.mxu0
        %v482 = vadd.f32 0.0, %v481
        %v483 = vpop.f32.mrf.mxu0
        %484 = vdwg.mxu0
        %v487 = vunpack.c.l.b16 %v420
        %v488 = vunpack.c.l.b16 %v421
        %v489 = vpack.c.b16 %v488, %v487
        %v492 = vunpack.c.l.b16 %v422
        %v493 = vunpack.c.l.b16 %v423
        %v494 = vpack.c.b16 %v493, %v492
        %v497 = vsel %vm440, %v489, 0
        %499 = vmatprep.subr.bf16.mxu0 0
        %500 = vmatpush1.bf16.msra.mxu0 0
        %501 = vmatprep.subr.bf16.mxu0 0
        %502 = vmatpush1.bf16.msra.mxu0 0
        %503 = vmatprep.subr.bf16.mxu0 0
        %504 = vmatpush1.bf16.msra.mxu0 0
        %505 = vmatprep.subr.bf16.mxu0 0
        %506 = vmatpush1.bf16.msra.mxu0 0
        %507 = vmatprep.subr.bf16.mxu0 0
        %508 = vmatpush1.bf16.msra.mxu0 0
        %509 = vmatprep.subr.bf16.mxu0 0
        %510 = vmatpush1.bf16.msra.mxu0 0
        %511 = vmatprep.subr.bf16.mxu0 0
        %512 = vmatpush1.bf16.msra.mxu0 0
        %513 = vmatprep.subr.bf16.mxu0 0
        %514 = vmatpush1.bf16.msra.mxu0 %v494
        %515 = vmatprep.subr.bf16.mxu0 0
        %516 = vmatpush2.bf16.msra.mxu0 0
        %517 = vmatprep.subr.bf16.mxu0 0
        %518 = vmatpush2.bf16.msra.mxu0 0
        %519 = vmatprep.subr.bf16.mxu0 0
        %520 = vmatpush2.bf16.msra.mxu0 0
        %521 = vmatprep.subr.bf16.mxu0 0
        %522 = vmatpush2.bf16.msra.mxu0 0
        %523 = vmatprep.subr.bf16.mxu0 0
        %524 = vmatpush2.bf16.msra.mxu0 0
        %525 = vmatprep.subr.bf16.mxu0 0
        %526 = vmatpush2.bf16.msra.mxu0 0
        %527 = vmatprep.subr.bf16.mxu0 0
        %528 = vmatpush2.bf16.msra.mxu0 0
        %529 = vmatprep.subr.bf16.mxu0 0
        %530 = vmatpush2.bf16.msra.mxu0 0
        %531 = vmatprep.mubr.bf16.mxu0 0
        %532 = vmatmul.mubr.bf16.gmra.mxu0 %v497
        %v533 = vpop.f32.mrf.mxu0
        %v534 = vadd.f32 %v479, %v533
        %v535 = vpop.f32.mrf.mxu0
        %v536 = vpop.f32.mrf.mxu0
        %v537 = vadd.f32 %v482, %v536
        %v538 = vpop.f32.mrf.mxu0
        %539 = vdwg.mxu0
        %v540 = vld [vmem:[%s402] sm:$0xf]
        %v541 = vld [vmem:[%s402 + $0x4] sm:$0xf]
        %s542 = scalar_lea.vmem %s6, 16
        %v543 = vld [vmem:[%s542] sm:$0xf]
        %v544 = vld [vmem:[%s542 + $0x4] sm:$0xf]
        %v547 = vunpack.c.l.b16 %v540
        %v548 = vunpack.c.l.b16 %v541
        %v549 = vpack.c.b16 %v548, %v547
        %v552 = vunpack.c.l.b16 %v543
        %v553 = vunpack.c.l.b16 %v544
        %v554 = vpack.c.b16 %v553, %v552
        %v557 = vsel %vm440, %v549, 0
        %559 = vmatprep.subr.bf16.mxu0 0
        %560 = vmatpush1.bf16.msra.mxu0 0
        %561 = vmatprep.subr.bf16.mxu0 0
        %562 = vmatpush1.bf16.msra.mxu0 0
        %563 = vmatprep.subr.bf16.mxu0 0
        %564 = vmatpush1.bf16.msra.mxu0 0
        %565 = vmatprep.subr.bf16.mxu0 0
        %566 = vmatpush1.bf16.msra.mxu0 0
        %567 = vmatprep.subr.bf16.mxu0 0
        %568 = vmatpush1.bf16.msra.mxu0 0
        %569 = vmatprep.subr.bf16.mxu0 0
        %570 = vmatpush1.bf16.msra.mxu0 0
        %571 = vmatprep.subr.bf16.mxu0 0
        %572 = vmatpush1.bf16.msra.mxu0 0
        %573 = vmatprep.subr.bf16.mxu0 0
        %574 = vmatpush1.bf16.msra.mxu0 %v554
        %575 = vmatprep.subr.bf16.mxu0 0
        %576 = vmatpush2.bf16.msra.mxu0 0
        %577 = vmatprep.subr.bf16.mxu0 0
        %578 = vmatpush2.bf16.msra.mxu0 0
        %579 = vmatprep.subr.bf16.mxu0 0
        %580 = vmatpush2.bf16.msra.mxu0 0
        %581 = vmatprep.subr.bf16.mxu0 0
        %582 = vmatpush2.bf16.msra.mxu0 0
        %583 = vmatprep.subr.bf16.mxu0 0
        %584 = vmatpush2.bf16.msra.mxu0 0
        %585 = vmatprep.subr.bf16.mxu0 0
        %586 = vmatpush2.bf16.msra.mxu0 0
        %587 = vmatprep.subr.bf16.mxu0 0
        %588 = vmatpush2.bf16.msra.mxu0 0
        %589 = vmatprep.subr.bf16.mxu0 0
        %590 = vmatpush2.bf16.msra.mxu0 0
        %591 = vmatprep.mubr.bf16.mxu0 0
        %592 = vmatmul.mubr.bf16.gmra.mxu0 %v557
        %v593 = vpop.f32.mrf.mxu0
        %v594 = vadd.f32 0.0, %v593
        %v595 = vpop.f32.mrf.mxu0
        %v596 = vpop.f32.mrf.mxu0
        %v597 = vadd.f32 0.0, %v596
        %v598 = vpop.f32.mrf.mxu0
        %599 = vdwg.mxu0
        %v600 = vadd.f32 %v534, %v594
        %v601 = vadd.f32 %v537, %v597
        %v602 = vld [vmem:[%s407] sm:$0xf]
        %v603 = vld [vmem:[%s407 + $0x4] sm:$0xf]
        %s604 = scalar_lea.vmem %s6, 24
        %v605 = vld [vmem:[%s604] sm:$0xf]
        %v606 = vld [vmem:[%s604 + $0x4] sm:$0xf]
        %v609 = vunpack.c.l.b16 %v602
        %v610 = vunpack.c.l.b16 %v603
        %v611 = vpack.c.b16 %v610, %v609
        %v614 = vunpack.c.l.b16 %v605
        %v615 = vunpack.c.l.b16 %v606
        %v616 = vpack.c.b16 %v615, %v614
        %v619 = vsel %vm440, %v611, 0
        %621 = vmatprep.subr.bf16.mxu0 0
        %622 = vmatpush1.bf16.msra.mxu0 0
        %623 = vmatprep.subr.bf16.mxu0 0
        %624 = vmatpush1.bf16.msra.mxu0 0
        %625 = vmatprep.subr.bf16.mxu0 0
        %626 = vmatpush1.bf16.msra.mxu0 0
        %627 = vmatprep.subr.bf16.mxu0 0
        %628 = vmatpush1.bf16.msra.mxu0 0
        %629 = vmatprep.subr.bf16.mxu0 0
        %630 = vmatpush1.bf16.msra.mxu0 0
        %631 = vmatprep.subr.bf16.mxu0 0
        %632 = vmatpush1.bf16.msra.mxu0 0
        %633 = vmatprep.subr.bf16.mxu0 0
        %634 = vmatpush1.bf16.msra.mxu0 0
        %635 = vmatprep.subr.bf16.mxu0 0
        %636 = vmatpush1.bf16.msra.mxu0 %v616
        %637 = vmatprep.subr.bf16.mxu0 0
        %638 = vmatpush2.bf16.msra.mxu0 0
        %639 = vmatprep.subr.bf16.mxu0 0
        %640 = vmatpush2.bf16.msra.mxu0 0
        %641 = vmatprep.subr.bf16.mxu0 0
        %642 = vmatpush2.bf16.msra.mxu0 0
        %643 = vmatprep.subr.bf16.mxu0 0
        %644 = vmatpush2.bf16.msra.mxu0 0
        %645 = vmatprep.subr.bf16.mxu0 0
        %646 = vmatpush2.bf16.msra.mxu0 0
        %647 = vmatprep.subr.bf16.mxu0 0
        %648 = vmatpush2.bf16.msra.mxu0 0
        %649 = vmatprep.subr.bf16.mxu0 0
        %650 = vmatpush2.bf16.msra.mxu0 0
        %651 = vmatprep.subr.bf16.mxu0 0
        %652 = vmatpush2.bf16.msra.mxu0 0
        %653 = vmatprep.mubr.bf16.mxu0 0
        %654 = vmatmul.mubr.bf16.gmra.mxu0 %v619
        %v655 = vpop.f32.mrf.mxu0
        %v656 = vadd.f32 0.0, %v655
        %v657 = vpop.f32.mrf.mxu0
        %v658 = vpop.f32.mrf.mxu0
        %v659 = vadd.f32 0.0, %v658
        %v660 = vpop.f32.mrf.mxu0
        %661 = vdwg.mxu0
        %v662 = vadd.f32 %v600, %v656
        %v663 = vadd.f32 %v601, %v659
        %v664 = vld [vmem:[%s412] sm:$0xf]
        %v665 = vld [vmem:[%s412 + $0x4] sm:$0xf]
        %s666 = scalar_lea.vmem %s6, 32
        %v667 = vld [vmem:[%s666] sm:$0xf]
        %v668 = vld [vmem:[%s666 + $0x4] sm:$0xf]
        %v671 = vunpack.c.l.b16 %v664
        %v672 = vunpack.c.l.b16 %v665
        %v673 = vpack.c.b16 %v672, %v671
        %v676 = vunpack.c.l.b16 %v667
        %v677 = vunpack.c.l.b16 %v668
        %v678 = vpack.c.b16 %v677, %v676
        %v681 = vsel %vm440, %v673, 0
        %683 = vmatprep.subr.bf16.mxu0 0
        %684 = vmatpush1.bf16.msra.mxu0 0
        %685 = vmatprep.subr.bf16.mxu0 0
        %686 = vmatpush1.bf16.msra.mxu0 0
        %687 = vmatprep.subr.bf16.mxu0 0
        %688 = vmatpush1.bf16.msra.mxu0 0
        %689 = vmatprep.subr.bf16.mxu0 0
        %690 = vmatpush1.bf16.msra.mxu0 0
        %691 = vmatprep.subr.bf16.mxu0 0
        %692 = vmatpush1.bf16.msra.mxu0 0
        %693 = vmatprep.subr.bf16.mxu0 0
        %694 = vmatpush1.bf16.msra.mxu0 0
        %695 = vmatprep.subr.bf16.mxu0 0
        %696 = vmatpush1.bf16.msra.mxu0 0
        %697 = vmatprep.subr.bf16.mxu0 0
        %698 = vmatpush1.bf16.msra.mxu0 %v678
        %699 = vmatprep.subr.bf16.mxu0 0
        %700 = vmatpush2.bf16.msra.mxu0 0
        %701 = vmatprep.subr.bf16.mxu0 0
        %702 = vmatpush2.bf16.msra.mxu0 0
        %703 = vmatprep.subr.bf16.mxu0 0
        %704 = vmatpush2.bf16.msra.mxu0 0
        %705 = vmatprep.subr.bf16.mxu0 0
        %706 = vmatpush2.bf16.msra.mxu0 0
        %707 = vmatprep.subr.bf16.mxu0 0
        %708 = vmatpush2.bf16.msra.mxu0 0
        %709 = vmatprep.subr.bf16.mxu0 0
        %710 = vmatpush2.bf16.msra.mxu0 0
        %711 = vmatprep.subr.bf16.mxu0 0
        %712 = vmatpush2.bf16.msra.mxu0 0
        %713 = vmatprep.subr.bf16.mxu0 0
        %714 = vmatpush2.bf16.msra.mxu0 0
        %715 = vmatprep.mubr.bf16.mxu0 0
        %716 = vmatmul.mubr.bf16.gmra.mxu0 %v681
        %v717 = vpop.f32.mrf.mxu0
        %v718 = vadd.f32 0.0, %v717
        %v719 = vpop.f32.mrf.mxu0
        %v720 = vpop.f32.mrf.mxu0
        %v721 = vadd.f32 0.0, %v720
        %v722 = vpop.f32.mrf.mxu0
        %723 = vdwg.mxu0
        %v724 = vadd.f32 %v662, %v718
        %v725 = vadd.f32 %v663, %v721
        %v726 = vld [vmem:[%s417] sm:$0xf]
        %v727 = vld [vmem:[%s417 + $0x4] sm:$0xf]
        %s728 = scalar_lea.vmem %s6, 40
        %v729 = vld [vmem:[%s728] sm:$0xf]
        %v730 = vld [vmem:[%s728 + $0x4] sm:$0xf]
        %v733 = vunpack.c.l.b16 %v726
        %v734 = vunpack.c.l.b16 %v727
        %v735 = vpack.c.b16 %v734, %v733
        %v738 = vunpack.c.l.b16 %v729
        %v739 = vunpack.c.l.b16 %v730
        %v740 = vpack.c.b16 %v739, %v738
        %v743 = vsel %vm440, %v735, 0
        %745 = vmatprep.subr.bf16.mxu0 0
        %746 = vmatpush1.bf16.msra.mxu0 0
        %747 = vmatprep.subr.bf16.mxu0 0
        %748 = vmatpush1.bf16.msra.mxu0 0
        %749 = vmatprep.subr.bf16.mxu0 0
        %750 = vmatpush1.bf16.msra.mxu0 0
        %751 = vmatprep.subr.bf16.mxu0 0
        %752 = vmatpush1.bf16.msra.mxu0 0
        %753 = vmatprep.subr.bf16.mxu0 0
        %754 = vmatpush1.bf16.msra.mxu0 0
        %755 = vmatprep.subr.bf16.mxu0 0
        %756 = vmatpush1.bf16.msra.mxu0 0
        %757 = vmatprep.subr.bf16.mxu0 0
        %758 = vmatpush1.bf16.msra.mxu0 0
        %759 = vmatprep.subr.bf16.mxu0 0
        %760 = vmatpush1.bf16.msra.mxu0 %v740
        %761 = vmatprep.subr.bf16.mxu0 0
        %762 = vmatpush2.bf16.msra.mxu0 0
        %763 = vmatprep.subr.bf16.mxu0 0
        %764 = vmatpush2.bf16.msra.mxu0 0
        %765 = vmatprep.subr.bf16.mxu0 0
        %766 = vmatpush2.bf16.msra.mxu0 0
        %767 = vmatprep.subr.bf16.mxu0 0
        %768 = vmatpush2.bf16.msra.mxu0 0
        %769 = vmatprep.subr.bf16.mxu0 0
        %770 = vmatpush2.bf16.msra.mxu0 0
        %771 = vmatprep.subr.bf16.mxu0 0
        %772 = vmatpush2.bf16.msra.mxu0 0
        %773 = vmatprep.subr.bf16.mxu0 0
        %774 = vmatpush2.bf16.msra.mxu0 0
        %775 = vmatprep.subr.bf16.mxu0 0
        %776 = vmatpush2.bf16.msra.mxu0 0
        %777 = vmatprep.mubr.bf16.mxu0 0
        %778 = vmatmul.mubr.bf16.gmra.mxu0 %v743
        %v779 = vpop.f32.mrf.mxu0
        %v780 = vadd.f32 0.0, %v779
        %v781 = vpop.f32.mrf.mxu0
        %v782 = vpop.f32.mrf.mxu0
        %v783 = vadd.f32 0.0, %v782
        %v784 = vpop.f32.mrf.mxu0
        %785 = vdwg.mxu0
        %v786 = vadd.f32 %v724, %v780
        %v787 = vadd.f32 %v725, %v783
        %v788 = vld [vmem:[%s392] sm:$0xc]
        %v789 = vld [vmem:[%s392 + $0x4] sm:$0xf]
        %v790 = vld [vmem:[%s392 + $0x8] sm:$0x3]
        %s791 = scalar_lea.vmem %s6, 48
        %v792 = vld [vmem:[%s791] sm:$0xf]
        %v793 = vld [vmem:[%s791 + $0x4] sm:$0xf]
        %v797 = vunpack.c.l.b16 %v788
        %v798 = vunpack.c.l.b16 %v789
        %v799 = vunpack.c.l.b16 %v790
        %v800 = vpack.c.b16 %v798, %v797
        %v801 = vpack.c.b16 %v799, %v799
        %vm802 = vcmask 1045504
        %v803 = vrot.slane %v800, 2
        %v804 = vrot.slane %v801, 2
        %v805 = vsel %vm802, %v803, %v804
        %v808 = vunpack.c.l.b16 %v792
        %v809 = vunpack.c.l.b16 %v793
        %v810 = vpack.c.b16 %v809, %v808
        %v813 = vsel %vm440, %v805, 0
        %815 = vmatprep.subr.bf16.mxu0 0
        %816 = vmatpush1.bf16.msra.mxu0 0
        %817 = vmatprep.subr.bf16.mxu0 0
        %818 = vmatpush1.bf16.msra.mxu0 0
        %819 = vmatprep.subr.bf16.mxu0 0
        %820 = vmatpush1.bf16.msra.mxu0 0
        %821 = vmatprep.subr.bf16.mxu0 0
        %822 = vmatpush1.bf16.msra.mxu0 0
        %823 = vmatprep.subr.bf16.mxu0 0
        %824 = vmatpush1.bf16.msra.mxu0 0
        %825 = vmatprep.subr.bf16.mxu0 0
        %826 = vmatpush1.bf16.msra.mxu0 0
        %827 = vmatprep.subr.bf16.mxu0 0
        %828 = vmatpush1.bf16.msra.mxu0 0
        %829 = vmatprep.subr.bf16.mxu0 0
        %830 = vmatpush1.bf16.msra.mxu0 %v810
        %831 = vmatprep.subr.bf16.mxu0 0
        %832 = vmatpush2.bf16.msra.mxu0 0
        %833 = vmatprep.subr.bf16.mxu0 0
        %834 = vmatpush2.bf16.msra.mxu0 0
        %835 = vmatprep.subr.bf16.mxu0 0
        %836 = vmatpush2.bf16.msra.mxu0 0
        %837 = vmatprep.subr.bf16.mxu0 0
        %838 = vmatpush2.bf16.msra.mxu0 0
        %839 = vmatprep.subr.bf16.mxu0 0
        %840 = vmatpush2.bf16.msra.mxu0 0
        %841 = vmatprep.subr.bf16.mxu0 0
        %842 = vmatpush2.bf16.msra.mxu0 0
        %843 = vmatprep.subr.bf16.mxu0 0
        %844 = vmatpush2.bf16.msra.mxu0 0
        %845 = vmatprep.subr.bf16.mxu0 0
        %846 = vmatpush2.bf16.msra.mxu0 0
        %847 = vmatprep.mubr.bf16.mxu0 0
        %848 = vmatmul.mubr.bf16.gmra.mxu0 %v813
        %v849 = vpop.f32.mrf.mxu0
        %v850 = vadd.f32 0.0, %v849
        %v851 = vpop.f32.mrf.mxu0
        %v852 = vpop.f32.mrf.mxu0
        %v853 = vadd.f32 0.0, %v852
        %v854 = vpop.f32.mrf.mxu0
        %855 = vdwg.mxu0
        %v856 = vadd.f32 %v786, %v850
        %v857 = vadd.f32 %v787, %v853
        %v858 = vld [vmem:[%s397] sm:$0xc]
        %v859 = vld [vmem:[%s397 + $0x4] sm:$0xf]
        %v860 = vld [vmem:[%s397 + $0x8] sm:$0x3]
        %s861 = scalar_lea.vmem %s6, 56
        %v862 = vld [vmem:[%s861] sm:$0xf]
        %v863 = vld [vmem:[%s861 + $0x4] sm:$0xf]
        %v867 = vunpack.c.l.b16 %v858
        %v868 = vunpack.c.l.b16 %v859
        %v869 = vunpack.c.l.b16 %v860
        %v870 = vpack.c.b16 %v868, %v867
        %v871 = vpack.c.b16 %v869, %v869
        %v872 = vrot.slane %v870, 2
        %v873 = vrot.slane %v871, 2
        %v874 = vsel %vm802, %v872, %v873
        %v877 = vunpack.c.l.b16 %v862
        %v878 = vunpack.c.l.b16 %v863
        %v879 = vpack.c.b16 %v878, %v877
        %v882 = vsel %vm440, %v874, 0
        %884 = vmatprep.subr.bf16.mxu0 0
        %885 = vmatpush1.bf16.msra.mxu0 0
        %886 = vmatprep.subr.bf16.mxu0 0
        %887 = vmatpush1.bf16.msra.mxu0 0
        %888 = vmatprep.subr.bf16.mxu0 0
        %889 = vmatpush1.bf16.msra.mxu0 0
        %890 = vmatprep.subr.bf16.mxu0 0
        %891 = vmatpush1.bf16.msra.mxu0 0
        %892 = vmatprep.subr.bf16.mxu0 0
        %893 = vmatpush1.bf16.msra.mxu0 0
        %894 = vmatprep.subr.bf16.mxu0 0
        %895 = vmatpush1.bf16.msra.mxu0 0
        %896 = vmatprep.subr.bf16.mxu0 0
        %897 = vmatpush1.bf16.msra.mxu0 0
        %898 = vmatprep.subr.bf16.mxu0 0
        %899 = vmatpush1.bf16.msra.mxu0 %v879
        %900 = vmatprep.subr.bf16.mxu0 0
        %901 = vmatpush2.bf16.msra.mxu0 0
        %902 = vmatprep.subr.bf16.mxu0 0
        %903 = vmatpush2.bf16.msra.mxu0 0
        %904 = vmatprep.subr.bf16.mxu0 0
        %905 = vmatpush2.bf16.msra.mxu0 0
        %906 = vmatprep.subr.bf16.mxu0 0
        %907 = vmatpush2.bf16.msra.mxu0 0
        %908 = vmatprep.subr.bf16.mxu0 0
        %909 = vmatpush2.bf16.msra.mxu0 0
        %910 = vmatprep.subr.bf16.mxu0 0
        %911 = vmatpush2.bf16.msra.mxu0 0
        %912 = vmatprep.subr.bf16.mxu0 0
        %913 = vmatpush2.bf16.msra.mxu0 0
        %914 = vmatprep.subr.bf16.mxu0 0
        %915 = vmatpush2.bf16.msra.mxu0 0
        %916 = vmatprep.mubr.bf16.mxu0 0
        %917 = vmatmul.mubr.bf16.gmra.mxu0 %v882
        %v918 = vpop.f32.mrf.mxu0
        %v919 = vadd.f32 0.0, %v918
        %v920 = vpop.f32.mrf.mxu0
        %v921 = vpop.f32.mrf.mxu0
        %v922 = vadd.f32 0.0, %v921
        %v923 = vpop.f32.mrf.mxu0
        %924 = vdwg.mxu0
        %v925 = vadd.f32 %v856, %v919
        %v926 = vadd.f32 %v857, %v922
        %v927 = vld [vmem:[%s402] sm:$0xc]
        %v928 = vld [vmem:[%s402 + $0x4] sm:$0xf]
        %v929 = vld [vmem:[%s402 + $0x8] sm:$0x3]
        %s930 = scalar_lea.vmem %s6, 64
        %v931 = vld [vmem:[%s930] sm:$0xf]
        %v932 = vld [vmem:[%s930 + $0x4] sm:$0xf]
        %v936 = vunpack.c.l.b16 %v927
        %v937 = vunpack.c.l.b16 %v928
        %v938 = vunpack.c.l.b16 %v929
        %v939 = vpack.c.b16 %v937, %v936
        %v940 = vpack.c.b16 %v938, %v938
        %v941 = vrot.slane %v939, 2
        %v942 = vrot.slane %v940, 2
        %v943 = vsel %vm802, %v941, %v942
        %v946 = vunpack.c.l.b16 %v931
        %v947 = vunpack.c.l.b16 %v932
        %v948 = vpack.c.b16 %v947, %v946
        %v951 = vsel %vm440, %v943, 0
        %953 = vmatprep.subr.bf16.mxu0 0
        %954 = vmatpush1.bf16.msra.mxu0 0
        %955 = vmatprep.subr.bf16.mxu0 0
        %956 = vmatpush1.bf16.msra.mxu0 0
        %957 = vmatprep.subr.bf16.mxu0 0
        %958 = vmatpush1.bf16.msra.mxu0 0
        %959 = vmatprep.subr.bf16.mxu0 0
        %960 = vmatpush1.bf16.msra.mxu0 0
        %961 = vmatprep.subr.bf16.mxu0 0
        %962 = vmatpush1.bf16.msra.mxu0 0
        %963 = vmatprep.subr.bf16.mxu0 0
        %964 = vmatpush1.bf16.msra.mxu0 0
        %965 = vmatprep.subr.bf16.mxu0 0
        %966 = vmatpush1.bf16.msra.mxu0 0
        %967 = vmatprep.subr.bf16.mxu0 0
        %968 = vmatpush1.bf16.msra.mxu0 %v948
        %969 = vmatprep.subr.bf16.mxu0 0
        %970 = vmatpush2.bf16.msra.mxu0 0
        %971 = vmatprep.subr.bf16.mxu0 0
        %972 = vmatpush2.bf16.msra.mxu0 0
        %973 = vmatprep.subr.bf16.mxu0 0
        %974 = vmatpush2.bf16.msra.mxu0 0
        %975 = vmatprep.subr.bf16.mxu0 0
        %976 = vmatpush2.bf16.msra.mxu0 0
        %977 = vmatprep.subr.bf16.mxu0 0
        %978 = vmatpush2.bf16.msra.mxu0 0
        %979 = vmatprep.subr.bf16.mxu0 0
        %980 = vmatpush2.bf16.msra.mxu0 0
        %981 = vmatprep.subr.bf16.mxu0 0
        %982 = vmatpush2.bf16.msra.mxu0 0
        %983 = vmatprep.subr.bf16.mxu0 0
        %984 = vmatpush2.bf16.msra.mxu0 0
        %985 = vmatprep.mubr.bf16.mxu0 0
        %986 = vmatmul.mubr.bf16.gmra.mxu0 %v951
        %v987 = vpop.f32.mrf.mxu0
        %v988 = vadd.f32 0.0, %v987
        %v989 = vpop.f32.mrf.mxu0
        %v990 = vpop.f32.mrf.mxu0
        %v991 = vadd.f32 0.0, %v990
        %v992 = vpop.f32.mrf.mxu0
        %993 = vdwg.mxu0
        %v994 = vadd.f32 %v925, %v988
        %v995 = vadd.f32 %v926, %v991
        %v996 = vld [vmem:[%s7] sm:$0x1]
        %v998 = vlaneseq
        %v999 = vshrl.u32 %v998, 7
        %v1000 = vsub.s32 0, %v999
        %v1001 = vrot.slane %v996, %v1000
        %v1003 = vadd.f32 %v994, %v1001
        %v1004 = vadd.f32 %v995, %v1001
        %vm1005 = vcmask 261120
        %1006 = vst.msk [vmem:[%s387] sm:$0xff] %vm1005, %v1003
        %1007 = vst.msk [vmem:[%s387 + $0x8] sm:$0xff] %vm1005, %v1004
        %s1008 = sand.u32 %s242, 1
        %s1009 = scalar_lea.sflag [#allocation3], %s1008
        %s1010 = sand.u32 %s242, 1
        %s1011 = smul.addr %s1010, 16
        %s1012 = scalar_lea.vmem [#allocation2], %s1011
        // Predicated region
        $region53: #{conv_tokenizer_forward.3} parent=51 // pred_check
          %p1013 = pneg %p252
        $region54: #{conv_tokenizer_forward.3} parent=51 // pred_check_branch
          %1015 = sbr.rel (%p1013) target = $region56
        $region55: #{conv_tokenizer_forward.3} parent=51 // pred_region
          %s1016 = smul.u32 2, %s27
          %s1018 = ssub.s32 256, 256
          %1019 = vsyncadd %s1009, %s1018
          %s1020 = smul.addr %s26, 2
          %s1021 = sadd.s32 %s1016, %s1020
          %s1022 = smul.addr %s1021, 128
          %s1023 = scalar_lea.hbm %s8, %s1022
          %s1024 = sshll.u32 %s1012, 4
          %s1025 = int_to_ptr.vmem [resolvable:$true] %s1024
          %1030 = dma.vmem_to_hbm [thread:$0]  %s1025, 256, %s1023, %s1009, 128, 128, 8
        $region56: #{conv_tokenizer_forward.3} parent=51 // pred_fallthru
          _
      $region52: #{conv_tokenizer_forward.3} parent=5 // pred_fallthru
        _
      %p1031 = scmp.le.s32.totalorder 2, %s17
      // Predicated region
      $region57: #{conv_tokenizer_forward.3} parent=5 // pred_check
        %p1032 = pneg %p1031
      $region58: #{conv_tokenizer_forward.3} parent=5 // pred_check_branch
        %1034 = sbr.rel (%p1032) target = $region60
      $region59: #{conv_tokenizer_forward.3} parent=5 // pred_region
        %s1035 = ssub.s32 %s17, 2
        // Predicated region
        $region61: #{conv_tokenizer_forward.3} parent=59 // pred_check
          %p1036 = pneg %p258
        $region62: #{conv_tokenizer_forward.3} parent=59 // pred_check_branch
          %1038 = sbr.rel (%p1036) target = $region64
        $region63: #{conv_tokenizer_forward.3} parent=59 // pred_region
          %s1039 = sand.u32 %s243, 1
          %s1040 = scalar_lea.sflag [#allocation3], %s1039
          %s1041 = sand.u32 %s243, 1
          %s1042 = smul.addr %s1041, 16
          %s1043 = scalar_lea.vmem [#allocation2], %s1042
          %1044 = dma.done %s1040, 256
        $region64: #{conv_tokenizer_forward.3} parent=59 // pred_fallthru
          _
      $region60: #{conv_tokenizer_forward.3} parent=5 // pred_fallthru
        _
    $region6: #{conv_tokenizer_forward.3} parent=1 // loop_footer
      %s21 = sadd.s32 1, %s17
    $region7: #{conv_tokenizer_forward.3} parent=1 // loop_footer_branch
      %16 = sbr.rel target = $region3
    $region8: #{conv_tokenizer_forward.3} parent=1 // loop_exit
      _
    %1045 = vsyncpa [#allocation3], 1
    %s1046 = scalar_lea.sflag [#allocation3], 1
    %1047 = vsyncpa %s1046, 1

</llo_original>
